<compile_context>
chip_gen: v5e
topology: v5e:2x2
jax: 0.10.0
libtpu: 0.0.40
codegen_flags: <defaults>
</compile_context>

<pallas_src>
import functools

import jax
import jax.numpy as jnp
from jax.experimental import pallas as pl
from jax.experimental.pallas import tpu as pltpu

VMEM = pltpu.MemorySpace.VMEM


# -----------------------------------------------------------------------------
# Fused kernel: all flows of Flow_aff.forward in one program.
#
# Layout inside the kernel (everything 2-D, lanes = B*K):
#   x / z : (C_total, B*K)      hist : (F, B*K)      pool : (B, B*K) 0/1 matrix
#   per flow k: w1 (H, F+na), b1 (H, 1), w2 (2*nb, H), b2 (2*nb, 1)
# -----------------------------------------------------------------------------
def _flow_aff_fused_kernel(flows, shift, feats_base,
                           x_ref, h_ref, pool_ref, *rest):
    n_w = 4 * flows
    w_refs = rest[:n_w]
    z_ref = rest[n_w]
    ld_ref = rest[n_w + 1]

    c_total, n_lanes = x_ref.shape

    # Bring the working tensor into the resident output buffer once; every flow then
    # updates only its transformed half in place.  Finished (split-off) chunks simply
    # stay where they are, so at the end z_ref already equals Z = cat(output_z, dim=1).
    z_ref[...] = x_ref[...]
    hist = h_ref[...]                                     # (F, B*K)

    acc = jnp.zeros((1, n_lanes), jnp.float32)            # per-(b,k) log|det| accum
    off = 0
    for k in range(flows):
        if k % shift == 0 and k > 0:
            off += feats_base                             # channel split -> shrink active suffix
        c_k = c_total - off
        na = c_k // 2                                     # pass-through / conditioning half
        nb = c_k - na                                     # transformed half

        w1 = w_refs[4 * k][...]                           # (H, F + na)  [hist | x_a] fused
        b1 = w_refs[4 * k + 1][...]                       # (H, 1)
        w2 = w_refs[4 * k + 2][...]                       # (2*nb, H)    [log_s ; t] fused
        b2 = w_refs[4 * k + 3][...]                       # (2*nb, 1)

        xa = z_ref[off:off + na, :]                       # (na, B*K)  (never re-stored)
        xb = z_ref[off + na:, :]                          # (nb, B*K)

        inp = jnp.concatenate([hist, xa], axis=0)         # (F + na, B*K)
        h1 = jnp.dot(w1, inp, preferred_element_type=jnp.float32) + b1
        h1 = jnp.maximum(h1, 0.0)                         # (H, B*K)
        st = jnp.dot(w2, h1, preferred_element_type=jnp.float32) + b2   # (2*nb, B*K)
        log_s = st[:nb, :]
        t = st[nb:, :]

        # In-place update of the transformed half only.
        z_ref[off + na:, :] = (jnp.exp(log_s) * xb + t).astype(z_ref.dtype)

        acc = acc + jnp.sum(log_s, axis=0, keepdims=True)  # (1, B*K)

    # Per-batch reduction of the accumulated log|det|:  ld[b] = sum_k acc[0, b*K + k].
    # pool is a 0/1 (B, B*K) matrix; multiply + lane-reduce (VPU + XLU, no skinny matmul).
    ld_ref[...] = jnp.sum(acc * pool_ref[...], axis=1, keepdims=True)   # (B, 1)


# -----------------------------------------------------------------------------
# Wrapper: layout plumbing + single pallas_call.
# -----------------------------------------------------------------------------
@functools.partial(jax.jit, static_argnames=("blocks", "flows"))
def flow_aff_forward(future_enc, history_enc, params, *, blocks, flows):
    B, C, K = future_enc.shape
    F = history_enc.shape[1]
    feats_base = C // blocks
    shift = flows // blocks
    N = B * K

    # PyTorch NCW (B, C, K)  ->  lane-dense (C, B*K) slabs (layout plumbing only).
    x2 = jnp.transpose(future_enc, (1, 0, 2)).reshape(C, N)
    h2 = jnp.transpose(history_enc, (1, 0, 2)).reshape(F, N)
    # 0/1 batch-pooling matrix: pool[b, n] = 1  iff lane n belongs to batch b.
    pool = jnp.repeat(jnp.eye(B, dtype=jnp.float32), K, axis=1)          # (B, B*K)

    flat_w = []
    for p in params:
        flat_w.extend([p["w1"], p["b1"], p["w2"], p["b2"]])

    kernel = functools.partial(_flow_aff_fused_kernel, flows, shift, feats_base)
    z2, ld = pl.pallas_call(
        kernel,
        out_shape=(jax.ShapeDtypeStruct((C, N), future_enc.dtype),
                   jax.ShapeDtypeStruct((B, 1), jnp.float32)),
        in_specs=[pl.BlockSpec(memory_space=VMEM)] * (3 + 4 * flows),
        out_specs=(pl.BlockSpec(memory_space=VMEM),
                   pl.BlockSpec(memory_space=VMEM)),
    )(x2, h2, pool, *flat_w)

    Z = jnp.transpose(z2.reshape(C, B, K), (1, 0, 2))                    # (B, C, K)
    return Z, ld[:, 0]


# -----------------------------------------------------------------------------
# Parameter init (fused conditioner weights, built once — hoisted out of forward).
# -----------------------------------------------------------------------------
def init_params(key, feats_hidden, blocks, flows):
    feats_base = feats_hidden // blocks
    shift = flows // blocks
    H = feats_hidden          # conditioner hidden width
    F = feats_hidden          # history feature channels
    params = []
    feats_block = feats_hidden
    for i in range(flows):
        if i % shift == 0 and i > 0:
            feats_block -= feats_base
        c_k = feats_block
        na = c_k // 2
        nb = c_k - na
        k1, k2 = jax.random.split(jax.random.fold_in(key, i))
        params.append(dict(
            # fused in-projection over concat([history, x_a]):
            w1=0.1 * jax.random.normal(k1, (H, F + na), jnp.float32),
            b1=jnp.zeros((H, 1), jnp.float32),
            # fused out-projection producing [log_s ; t]:
            w2=0.05 * jax.random.normal(k2, (2 * nb, H), jnp.float32),
            b2=jnp.zeros((2 * nb, 1), jnp.float32),
        ))
    return params


if __name__ == "__main__":
    # small config consistent with the module: feats_hidden=32, blocks=4, flows=8, K=8, B=2
    B, K = 2, 8
    feats_hidden, blocks, flows = 32, 4, 8

    key = jax.random.PRNGKey(0)
    k_fut, k_his, k_par = jax.random.split(key, 3)
    future_enc = jax.random.normal(k_fut, (B, feats_hidden, K), jnp.float32)
    history_enc = jax.random.normal(k_his, (B, feats_hidden, K), jnp.float32)

    params = init_params(k_par, feats_hidden, blocks, flows)

    Z, log_det = flow_aff_forward(future_enc, history_enc, params,
                                  blocks=blocks, flows=flows)
    jax.block_until_ready((Z, log_det))

    assert Z.shape == (B, feats_hidden, K)
    assert log_det.shape == (B,)
    assert bool(jnp.all(jnp.isfinite(Z))) and bool(jnp.all(jnp.isfinite(log_det)))
    print("KERNEL_OK")
</pallas_src>

<mosaic_0001>
module attributes {stable_mosaic.version = 11 : i64} {
  func.func @_flow_aff_fused_kernel(%arg0: memref<32x16xf32, #tpu.memory_space<vmem>>, %arg1: memref<32x16xf32, #tpu.memory_space<vmem>>, %arg2: memref<2x16xf32, #tpu.memory_space<vmem>>, %arg3: memref<32x48xf32, #tpu.memory_space<vmem>>, %arg4: memref<32x1xf32, #tpu.memory_space<vmem>>, %arg5: memref<32x32xf32, #tpu.memory_space<vmem>>, %arg6: memref<32x1xf32, #tpu.memory_space<vmem>>, %arg7: memref<32x48xf32, #tpu.memory_space<vmem>>, %arg8: memref<32x1xf32, #tpu.memory_space<vmem>>, %arg9: memref<32x32xf32, #tpu.memory_space<vmem>>, %arg10: memref<32x1xf32, #tpu.memory_space<vmem>>, %arg11: memref<32x44xf32, #tpu.memory_space<vmem>>, %arg12: memref<32x1xf32, #tpu.memory_space<vmem>>, %arg13: memref<24x32xf32, #tpu.memory_space<vmem>>, %arg14: memref<24x1xf32, #tpu.memory_space<vmem>>, %arg15: memref<32x44xf32, #tpu.memory_space<vmem>>, %arg16: memref<32x1xf32, #tpu.memory_space<vmem>>, %arg17: memref<24x32xf32, #tpu.memory_space<vmem>>, %arg18: memref<24x1xf32, #tpu.memory_space<vmem>>, %arg19: memref<32x40xf32, #tpu.memory_space<vmem>>, %arg20: memref<32x1xf32, #tpu.memory_space<vmem>>, %arg21: memref<16x32xf32, #tpu.memory_space<vmem>>, %arg22: memref<16x1xf32, #tpu.memory_space<vmem>>, %arg23: memref<32x40xf32, #tpu.memory_space<vmem>>, %arg24: memref<32x1xf32, #tpu.memory_space<vmem>>, %arg25: memref<16x32xf32, #tpu.memory_space<vmem>>, %arg26: memref<16x1xf32, #tpu.memory_space<vmem>>, %arg27: memref<32x36xf32, #tpu.memory_space<vmem>>, %arg28: memref<32x1xf32, #tpu.memory_space<vmem>>, %arg29: memref<8x32xf32, #tpu.memory_space<vmem>>, %arg30: memref<8x1xf32, #tpu.memory_space<vmem>>, %arg31: memref<32x36xf32, #tpu.memory_space<vmem>>, %arg32: memref<32x1xf32, #tpu.memory_space<vmem>>, %arg33: memref<8x32xf32, #tpu.memory_space<vmem>>, %arg34: memref<8x1xf32, #tpu.memory_space<vmem>>, %arg35: memref<32x16xf32, #tpu.memory_space<vmem>>, %arg36: memref<2x1xf32, #tpu.memory_space<vmem>>) attributes {dimension_semantics = [], scalar_prefetch = 0 : i64, scratch_operands = 0 : i64, tpu.core_type = #tpu.core_type<tc>} {
    %c0 = arith.constant 0 : index
    %c0_0 = arith.constant 0 : index
    %0 = vector.load %arg0[%c0, %c0_0] : memref<32x16xf32, #tpu.memory_space<vmem>>, vector<32x16xf32>
    %c0_1 = arith.constant 0 : index
    %c0_2 = arith.constant 0 : index
    %1 = vector.load %arg35[%c0_1, %c0_2] : memref<32x16xf32, #tpu.memory_space<vmem>>, vector<32x16xf32>
    tpu.vector_store %arg35[%c0_1, %c0_2], %0 {strides = array<i32>} : memref<32x16xf32, #tpu.memory_space<vmem>>, vector<32x16xf32>,
    %c0_3 = arith.constant 0 : index
    %c0_4 = arith.constant 0 : index
    %2 = vector.load %arg1[%c0_3, %c0_4] : memref<32x16xf32, #tpu.memory_space<vmem>>, vector<32x16xf32>
    %cst = arith.constant 0.000000e+00 : f32
    %3 = vector.broadcast %cst : f32 to vector<1x16xf32>
    %c0_5 = arith.constant 0 : index
    %c0_6 = arith.constant 0 : index
    %4 = vector.load %arg3[%c0_5, %c0_6] : memref<32x48xf32, #tpu.memory_space<vmem>>, vector<32x48xf32>
    %c0_7 = arith.constant 0 : index
    %c0_8 = arith.constant 0 : index
    %5 = vector.load %arg4[%c0_7, %c0_8] : memref<32x1xf32, #tpu.memory_space<vmem>>, vector<32x1xf32>
    %c0_9 = arith.constant 0 : index
    %c0_10 = arith.constant 0 : index
    %6 = vector.load %arg5[%c0_9, %c0_10] : memref<32x32xf32, #tpu.memory_space<vmem>>, vector<32x32xf32>
    %c0_11 = arith.constant 0 : index
    %c0_12 = arith.constant 0 : index
    %7 = vector.load %arg6[%c0_11, %c0_12] : memref<32x1xf32, #tpu.memory_space<vmem>>, vector<32x1xf32>
    %c0_13 = arith.constant 0 : index
    %c0_14 = arith.constant 0 : index
    %8 = vector.load %arg35[%c0_13, %c0_14] : memref<32x16xf32, #tpu.memory_space<vmem>>, vector<16x16xf32>
    %c16 = arith.constant 16 : index
    %c0_15 = arith.constant 0 : index
    %9 = vector.load %arg35[%c16, %c0_15] : memref<32x16xf32, #tpu.memory_space<vmem>>, vector<16x16xf32>
    %10 = tpu.concatenate %2, %8 in 0 : vector<32x16xf32>, vector<16x16xf32> -> vector<48x16xf32>
    %cst_16 = arith.constant dense<0.000000e+00> : vector<32x16xf32>
    %11 = tpu.matmul %4, %10, %cst_16 {dimension_numbers = #tpu.dot_dimension_numbers<[1], [0], [0], [1], [0, 0, 1, 1], [], []>} : vector<32x48xf32>, vector<48x16xf32>, vector<32x16xf32> -> vector<32x16xf32>
    %12 = vector.broadcast %5 : vector<32x1xf32> to vector<32x16xf32>
    %13 = arith.addf %11, %12 : vector<32x16xf32>
    %cst_17 = arith.constant 0.000000e+00 : f32
    %14 = vector.broadcast %cst_17 : f32 to vector<32x16xf32>
    %15 = arith.maximumf %13, %14 : vector<32x16xf32>
    %cst_18 = arith.constant dense<0.000000e+00> : vector<32x16xf32>
    %16 = tpu.matmul %6, %15, %cst_18 {dimension_numbers = #tpu.dot_dimension_numbers<[1], [0], [0], [1], [0, 0, 1, 1], [], []>} : vector<32x32xf32>, vector<32x16xf32>, vector<32x16xf32> -> vector<32x16xf32>
    %17 = vector.broadcast %7 : vector<32x1xf32> to vector<32x16xf32>
    %18 = arith.addf %16, %17 : vector<32x16xf32>
    %19 = vector.extract_strided_slice %18 {offsets = [0, 0], sizes = [16, 16], strides = [1, 1]} : vector<32x16xf32> to vector<16x16xf32>
    %20 = vector.extract_strided_slice %18 {offsets = [16, 0], sizes = [16, 16], strides = [1, 1]} : vector<32x16xf32> to vector<16x16xf32>
    %21 = math.exp %19 : vector<16x16xf32>
    %22 = arith.mulf %21, %9 : vector<16x16xf32>
    %23 = arith.addf %22, %20 : vector<16x16xf32>
    %c16_19 = arith.constant 16 : index
    %c0_20 = arith.constant 0 : index
    %24 = vector.load %arg35[%c16_19, %c0_20] : memref<32x16xf32, #tpu.memory_space<vmem>>, vector<16x16xf32>
    tpu.vector_store %arg35[%c16_19, %c0_20], %23 {strides = array<i32>} : memref<32x16xf32, #tpu.memory_space<vmem>>, vector<16x16xf32>,
    %cst_21 = arith.constant dense<0.000000e+00> : vector<16xf32>
    %25 = vector.multi_reduction <add>, %19, %cst_21 [0] : vector<16x16xf32> to vector<16xf32>
    %26 = vector.shape_cast %25 : vector<16xf32> to vector<1x16xf32>
    %27 = arith.addf %3, %26 : vector<1x16xf32>
    %c0_22 = arith.constant 0 : index
    %c0_23 = arith.constant 0 : index
    %28 = vector.load %arg7[%c0_22, %c0_23] : memref<32x48xf32, #tpu.memory_space<vmem>>, vector<32x48xf32>
    %c0_24 = arith.constant 0 : index
    %c0_25 = arith.constant 0 : index
    %29 = vector.load %arg8[%c0_24, %c0_25] : memref<32x1xf32, #tpu.memory_space<vmem>>, vector<32x1xf32>
    %c0_26 = arith.constant 0 : index
    %c0_27 = arith.constant 0 : index
    %30 = vector.load %arg9[%c0_26, %c0_27] : memref<32x32xf32, #tpu.memory_space<vmem>>, vector<32x32xf32>
    %c0_28 = arith.constant 0 : index
    %c0_29 = arith.constant 0 : index
    %31 = vector.load %arg10[%c0_28, %c0_29] : memref<32x1xf32, #tpu.memory_space<vmem>>, vector<32x1xf32>
    %c0_30 = arith.constant 0 : index
    %c0_31 = arith.constant 0 : index
    %32 = vector.load %arg35[%c0_30, %c0_31] : memref<32x16xf32, #tpu.memory_space<vmem>>, vector<16x16xf32>
    %c16_32 = arith.constant 16 : index
    %c0_33 = arith.constant 0 : index
    %33 = vector.load %arg35[%c16_32, %c0_33] : memref<32x16xf32, #tpu.memory_space<vmem>>, vector<16x16xf32>
    %34 = tpu.concatenate %2, %32 in 0 : vector<32x16xf32>, vector<16x16xf32> -> vector<48x16xf32>
    %cst_34 = arith.constant dense<0.000000e+00> : vector<32x16xf32>
    %35 = tpu.matmul %28, %34, %cst_34 {dimension_numbers = #tpu.dot_dimension_numbers<[1], [0], [0], [1], [0, 0, 1, 1], [], []>} : vector<32x48xf32>, vector<48x16xf32>, vector<32x16xf32> -> vector<32x16xf32>
    %36 = vector.broadcast %29 : vector<32x1xf32> to vector<32x16xf32>
    %37 = arith.addf %35, %36 : vector<32x16xf32>
    %cst_35 = arith.constant 0.000000e+00 : f32
    %38 = vector.broadcast %cst_35 : f32 to vector<32x16xf32>
    %39 = arith.maximumf %37, %38 : vector<32x16xf32>
    %cst_36 = arith.constant dense<0.000000e+00> : vector<32x16xf32>
    %40 = tpu.matmul %30, %39, %cst_36 {dimension_numbers = #tpu.dot_dimension_numbers<[1], [0], [0], [1], [0, 0, 1, 1], [], []>} : vector<32x32xf32>, vector<32x16xf32>, vector<32x16xf32> -> vector<32x16xf32>
    %41 = vector.broadcast %31 : vector<32x1xf32> to vector<32x16xf32>
    %42 = arith.addf %40, %41 : vector<32x16xf32>
    %43 = vector.extract_strided_slice %42 {offsets = [0, 0], sizes = [16, 16], strides = [1, 1]} : vector<32x16xf32> to vector<16x16xf32>
    %44 = vector.extract_strided_slice %42 {offsets = [16, 0], sizes = [16, 16], strides = [1, 1]} : vector<32x16xf32> to vector<16x16xf32>
    %45 = math.exp %43 : vector<16x16xf32>
    %46 = arith.mulf %45, %33 : vector<16x16xf32>
    %47 = arith.addf %46, %44 : vector<16x16xf32>
    %c16_37 = arith.constant 16 : index
    %c0_38 = arith.constant 0 : index
    %48 = vector.load %arg35[%c16_37, %c0_38] : memref<32x16xf32, #tpu.memory_space<vmem>>, vector<16x16xf32>
    tpu.vector_store %arg35[%c16_37, %c0_38], %47 {strides = array<i32>} : memref<32x16xf32, #tpu.memory_space<vmem>>, vector<16x16xf32>,
    %cst_39 = arith.constant dense<0.000000e+00> : vector<16xf32>
    %49 = vector.multi_reduction <add>, %43, %cst_39 [0] : vector<16x16xf32> to vector<16xf32>
    %50 = vector.shape_cast %49 : vector<16xf32> to vector<1x16xf32>
    %51 = arith.addf %27, %50 : vector<1x16xf32>
    %c0_40 = arith.constant 0 : index
    %c0_41 = arith.constant 0 : index
    %52 = vector.load %arg11[%c0_40, %c0_41] : memref<32x44xf32, #tpu.memory_space<vmem>>, vector<32x44xf32>
    %c0_42 = arith.constant 0 : index
    %c0_43 = arith.constant 0 : index
    %53 = vector.load %arg12[%c0_42, %c0_43] : memref<32x1xf32, #tpu.memory_space<vmem>>, vector<32x1xf32>
    %c0_44 = arith.constant 0 : index
    %c0_45 = arith.constant 0 : index
    %54 = vector.load %arg13[%c0_44, %c0_45] : memref<24x32xf32, #tpu.memory_space<vmem>>, vector<24x32xf32>
    %c0_46 = arith.constant 0 : index
    %c0_47 = arith.constant 0 : index
    %55 = vector.load %arg14[%c0_46, %c0_47] : memref<24x1xf32, #tpu.memory_space<vmem>>, vector<24x1xf32>
    %c8 = arith.constant 8 : index
    %c0_48 = arith.constant 0 : index
    %56 = vector.load %arg35[%c8, %c0_48] : memref<32x16xf32, #tpu.memory_space<vmem>>, vector<12x16xf32>
    %c20 = arith.constant 20 : index
    %c0_49 = arith.constant 0 : index
    %57 = vector.load %arg35[%c20, %c0_49] : memref<32x16xf32, #tpu.memory_space<vmem>>, vector<12x16xf32>
    %58 = tpu.concatenate %2, %56 in 0 : vector<32x16xf32>, vector<12x16xf32> -> vector<44x16xf32>
    %cst_50 = arith.constant dense<0.000000e+00> : vector<32x16xf32>
    %59 = tpu.matmul %52, %58, %cst_50 {dimension_numbers = #tpu.dot_dimension_numbers<[1], [0], [0], [1], [0, 0, 1, 1], [], []>} : vector<32x44xf32>, vector<44x16xf32>, vector<32x16xf32> -> vector<32x16xf32>
    %60 = vector.broadcast %53 : vector<32x1xf32> to vector<32x16xf32>
    %61 = arith.addf %59, %60 : vector<32x16xf32>
    %cst_51 = arith.constant 0.000000e+00 : f32
    %62 = vector.broadcast %cst_51 : f32 to vector<32x16xf32>
    %63 = arith.maximumf %61, %62 : vector<32x16xf32>
    %cst_52 = arith.constant dense<0.000000e+00> : vector<24x16xf32>
    %64 = tpu.matmul %54, %63, %cst_52 {dimension_numbers = #tpu.dot_dimension_numbers<[1], [0], [0], [1], [0, 0, 1, 1], [], []>} : vector<24x32xf32>, vector<32x16xf32>, vector<24x16xf32> -> vector<24x16xf32>
    %65 = vector.broadcast %55 : vector<24x1xf32> to vector<24x16xf32>
    %66 = arith.addf %64, %65 : vector<24x16xf32>
    %67 = vector.extract_strided_slice %66 {offsets = [0, 0], sizes = [12, 16], strides = [1, 1]} : vector<24x16xf32> to vector<12x16xf32>
    %68 = vector.extract_strided_slice %66 {offsets = [12, 0], sizes = [12, 16], strides = [1, 1]} : vector<24x16xf32> to vector<12x16xf32>
    %69 = math.exp %67 : vector<12x16xf32>
    %70 = arith.mulf %69, %57 : vector<12x16xf32>
    %71 = arith.addf %70, %68 : vector<12x16xf32>
    %c20_53 = arith.constant 20 : index
    %c0_54 = arith.constant 0 : index
    %72 = vector.load %arg35[%c20_53, %c0_54] : memref<32x16xf32, #tpu.memory_space<vmem>>, vector<12x16xf32>
    tpu.vector_store %arg35[%c20_53, %c0_54], %71 {strides = array<i32>} : memref<32x16xf32, #tpu.memory_space<vmem>>, vector<12x16xf32>,
    %cst_55 = arith.constant dense<0.000000e+00> : vector<16xf32>
    %73 = vector.multi_reduction <add>, %67, %cst_55 [0] : vector<12x16xf32> to vector<16xf32>
    %74 = vector.shape_cast %73 : vector<16xf32> to vector<1x16xf32>
    %75 = arith.addf %51, %74 : vector<1x16xf32>
    %c0_56 = arith.constant 0 : index
    %c0_57 = arith.constant 0 : index
    %76 = vector.load %arg15[%c0_56, %c0_57] : memref<32x44xf32, #tpu.memory_space<vmem>>, vector<32x44xf32>
    %c0_58 = arith.constant 0 : index
    %c0_59 = arith.constant 0 : index
    %77 = vector.load %arg16[%c0_58, %c0_59] : memref<32x1xf32, #tpu.memory_space<vmem>>, vector<32x1xf32>
    %c0_60 = arith.constant 0 : index
    %c0_61 = arith.constant 0 : index
    %78 = vector.load %arg17[%c0_60, %c0_61] : memref<24x32xf32, #tpu.memory_space<vmem>>, vector<24x32xf32>
    %c0_62 = arith.constant 0 : index
    %c0_63 = arith.constant 0 : index
    %79 = vector.load %arg18[%c0_62, %c0_63] : memref<24x1xf32, #tpu.memory_space<vmem>>, vector<24x1xf32>
    %c8_64 = arith.constant 8 : index
    %c0_65 = arith.constant 0 : index
    %80 = vector.load %arg35[%c8_64, %c0_65] : memref<32x16xf32, #tpu.memory_space<vmem>>, vector<12x16xf32>
    %c20_66 = arith.constant 20 : index
    %c0_67 = arith.constant 0 : index
    %81 = vector.load %arg35[%c20_66, %c0_67] : memref<32x16xf32, #tpu.memory_space<vmem>>, vector<12x16xf32>
    %82 = tpu.concatenate %2, %80 in 0 : vector<32x16xf32>, vector<12x16xf32> -> vector<44x16xf32>
    %cst_68 = arith.constant dense<0.000000e+00> : vector<32x16xf32>
    %83 = tpu.matmul %76, %82, %cst_68 {dimension_numbers = #tpu.dot_dimension_numbers<[1], [0], [0], [1], [0, 0, 1, 1], [], []>} : vector<32x44xf32>, vector<44x16xf32>, vector<32x16xf32> -> vector<32x16xf32>
    %84 = vector.broadcast %77 : vector<32x1xf32> to vector<32x16xf32>
    %85 = arith.addf %83, %84 : vector<32x16xf32>
    %cst_69 = arith.constant 0.000000e+00 : f32
    %86 = vector.broadcast %cst_69 : f32 to vector<32x16xf32>
    %87 = arith.maximumf %85, %86 : vector<32x16xf32>
    %cst_70 = arith.constant dense<0.000000e+00> : vector<24x16xf32>
    %88 = tpu.matmul %78, %87, %cst_70 {dimension_numbers = #tpu.dot_dimension_numbers<[1], [0], [0], [1], [0, 0, 1, 1], [], []>} : vector<24x32xf32>, vector<32x16xf32>, vector<24x16xf32> -> vector<24x16xf32>
    %89 = vector.broadcast %79 : vector<24x1xf32> to vector<24x16xf32>
    %90 = arith.addf %88, %89 : vector<24x16xf32>
    %91 = vector.extract_strided_slice %90 {offsets = [0, 0], sizes = [12, 16], strides = [1, 1]} : vector<24x16xf32> to vector<12x16xf32>
    %92 = vector.extract_strided_slice %90 {offsets = [12, 0], sizes = [12, 16], strides = [1, 1]} : vector<24x16xf32> to vector<12x16xf32>
    %93 = math.exp %91 : vector<12x16xf32>
    %94 = arith.mulf %93, %81 : vector<12x16xf32>
    %95 = arith.addf %94, %92 : vector<12x16xf32>
    %c20_71 = arith.constant 20 : index
    %c0_72 = arith.constant 0 : index
    %96 = vector.load %arg35[%c20_71, %c0_72] : memref<32x16xf32, #tpu.memory_space<vmem>>, vector<12x16xf32>
    tpu.vector_store %arg35[%c20_71, %c0_72], %95 {strides = array<i32>} : memref<32x16xf32, #tpu.memory_space<vmem>>, vector<12x16xf32>,
    %cst_73 = arith.constant dense<0.000000e+00> : vector<16xf32>
    %97 = vector.multi_reduction <add>, %91, %cst_73 [0] : vector<12x16xf32> to vector<16xf32>
    %98 = vector.shape_cast %97 : vector<16xf32> to vector<1x16xf32>
    %99 = arith.addf %75, %98 : vector<1x16xf32>
    %c0_74 = arith.constant 0 : index
    %c0_75 = arith.constant 0 : index
    %100 = vector.load %arg19[%c0_74, %c0_75] : memref<32x40xf32, #tpu.memory_space<vmem>>, vector<32x40xf32>
    %c0_76 = arith.constant 0 : index
    %c0_77 = arith.constant 0 : index
    %101 = vector.load %arg20[%c0_76, %c0_77] : memref<32x1xf32, #tpu.memory_space<vmem>>, vector<32x1xf32>
    %c0_78 = arith.constant 0 : index
    %c0_79 = arith.constant 0 : index
    %102 = vector.load %arg21[%c0_78, %c0_79] : memref<16x32xf32, #tpu.memory_space<vmem>>, vector<16x32xf32>
    %c0_80 = arith.constant 0 : index
    %c0_81 = arith.constant 0 : index
    %103 = vector.load %arg22[%c0_80, %c0_81] : memref<16x1xf32, #tpu.memory_space<vmem>>, vector<16x1xf32>
    %c16_82 = arith.constant 16 : index
    %c0_83 = arith.constant 0 : index
    %104 = vector.load %arg35[%c16_82, %c0_83] : memref<32x16xf32, #tpu.memory_space<vmem>>, vector<8x16xf32>
    %c24 = arith.constant 24 : index
    %c0_84 = arith.constant 0 : index
    %105 = vector.load %arg35[%c24, %c0_84] : memref<32x16xf32, #tpu.memory_space<vmem>>, vector<8x16xf32>
    %106 = tpu.concatenate %2, %104 in 0 : vector<32x16xf32>, vector<8x16xf32> -> vector<40x16xf32>
    %cst_85 = arith.constant dense<0.000000e+00> : vector<32x16xf32>
    %107 = tpu.matmul %100, %106, %cst_85 {dimension_numbers = #tpu.dot_dimension_numbers<[1], [0], [0], [1], [0, 0, 1, 1], [], []>} : vector<32x40xf32>, vector<40x16xf32>, vector<32x16xf32> -> vector<32x16xf32>
    %108 = vector.broadcast %101 : vector<32x1xf32> to vector<32x16xf32>
    %109 = arith.addf %107, %108 : vector<32x16xf32>
    %cst_86 = arith.constant 0.000000e+00 : f32
    %110 = vector.broadcast %cst_86 : f32 to vector<32x16xf32>
    %111 = arith.maximumf %109, %110 : vector<32x16xf32>
    %cst_87 = arith.constant dense<0.000000e+00> : vector<16x16xf32>
    %112 = tpu.matmul %102, %111, %cst_87 {dimension_numbers = #tpu.dot_dimension_numbers<[1], [0], [0], [1], [0, 0, 1, 1], [], []>} : vector<16x32xf32>, vector<32x16xf32>, vector<16x16xf32> -> vector<16x16xf32>
    %113 = vector.broadcast %103 : vector<16x1xf32> to vector<16x16xf32>
    %114 = arith.addf %112, %113 : vector<16x16xf32>
    %115 = vector.extract_strided_slice %114 {offsets = [0, 0], sizes = [8, 16], strides = [1, 1]} : vector<16x16xf32> to vector<8x16xf32>
    %116 = vector.extract_strided_slice %114 {offsets = [8, 0], sizes = [8, 16], strides = [1, 1]} : vector<16x16xf32> to vector<8x16xf32>
    %117 = math.exp %115 : vector<8x16xf32>
    %118 = arith.mulf %117, %105 : vector<8x16xf32>
    %119 = arith.addf %118, %116 : vector<8x16xf32>
    %c24_88 = arith.constant 24 : index
    %c0_89 = arith.constant 0 : index
    %120 = vector.load %arg35[%c24_88, %c0_89] : memref<32x16xf32, #tpu.memory_space<vmem>>, vector<8x16xf32>
    tpu.vector_store %arg35[%c24_88, %c0_89], %119 {strides = array<i32>} : memref<32x16xf32, #tpu.memory_space<vmem>>, vector<8x16xf32>,
    %cst_90 = arith.constant dense<0.000000e+00> : vector<16xf32>
    %121 = vector.multi_reduction <add>, %115, %cst_90 [0] : vector<8x16xf32> to vector<16xf32>
    %122 = vector.shape_cast %121 : vector<16xf32> to vector<1x16xf32>
    %123 = arith.addf %99, %122 : vector<1x16xf32>
    %c0_91 = arith.constant 0 : index
    %c0_92 = arith.constant 0 : index
    %124 = vector.load %arg23[%c0_91, %c0_92] : memref<32x40xf32, #tpu.memory_space<vmem>>, vector<32x40xf32>
    %c0_93 = arith.constant 0 : index
    %c0_94 = arith.constant 0 : index
    %125 = vector.load %arg24[%c0_93, %c0_94] : memref<32x1xf32, #tpu.memory_space<vmem>>, vector<32x1xf32>
    %c0_95 = arith.constant 0 : index
    %c0_96 = arith.constant 0 : index
    %126 = vector.load %arg25[%c0_95, %c0_96] : memref<16x32xf32, #tpu.memory_space<vmem>>, vector<16x32xf32>
    %c0_97 = arith.constant 0 : index
    %c0_98 = arith.constant 0 : index
    %127 = vector.load %arg26[%c0_97, %c0_98] : memref<16x1xf32, #tpu.memory_space<vmem>>, vector<16x1xf32>
    %c16_99 = arith.constant 16 : index
    %c0_100 = arith.constant 0 : index
    %128 = vector.load %arg35[%c16_99, %c0_100] : memref<32x16xf32, #tpu.memory_space<vmem>>, vector<8x16xf32>
    %c24_101 = arith.constant 24 : index
    %c0_102 = arith.constant 0 : index
    %129 = vector.load %arg35[%c24_101, %c0_102] : memref<32x16xf32, #tpu.memory_space<vmem>>, vector<8x16xf32>
    %130 = tpu.concatenate %2, %128 in 0 : vector<32x16xf32>, vector<8x16xf32> -> vector<40x16xf32>
    %cst_103 = arith.constant dense<0.000000e+00> : vector<32x16xf32>
    %131 = tpu.matmul %124, %130, %cst_103 {dimension_numbers = #tpu.dot_dimension_numbers<[1], [0], [0], [1], [0, 0, 1, 1], [], []>} : vector<32x40xf32>, vector<40x16xf32>, vector<32x16xf32> -> vector<32x16xf32>
    %132 = vector.broadcast %125 : vector<32x1xf32> to vector<32x16xf32>
    %133 = arith.addf %131, %132 : vector<32x16xf32>
    %cst_104 = arith.constant 0.000000e+00 : f32
    %134 = vector.broadcast %cst_104 : f32 to vector<32x16xf32>
    %135 = arith.maximumf %133, %134 : vector<32x16xf32>
    %cst_105 = arith.constant dense<0.000000e+00> : vector<16x16xf32>
    %136 = tpu.matmul %126, %135, %cst_105 {dimension_numbers = #tpu.dot_dimension_numbers<[1], [0], [0], [1], [0, 0, 1, 1], [], []>} : vector<16x32xf32>, vector<32x16xf32>, vector<16x16xf32> -> vector<16x16xf32>
    %137 = vector.broadcast %127 : vector<16x1xf32> to vector<16x16xf32>
    %138 = arith.addf %136, %137 : vector<16x16xf32>
    %139 = vector.extract_strided_slice %138 {offsets = [0, 0], sizes = [8, 16], strides = [1, 1]} : vector<16x16xf32> to vector<8x16xf32>
    %140 = vector.extract_strided_slice %138 {offsets = [8, 0], sizes = [8, 16], strides = [1, 1]} : vector<16x16xf32> to vector<8x16xf32>
    %141 = math.exp %139 : vector<8x16xf32>
    %142 = arith.mulf %141, %129 : vector<8x16xf32>
    %143 = arith.addf %142, %140 : vector<8x16xf32>
    %c24_106 = arith.constant 24 : index
    %c0_107 = arith.constant 0 : index
    %144 = vector.load %arg35[%c24_106, %c0_107] : memref<32x16xf32, #tpu.memory_space<vmem>>, vector<8x16xf32>
    tpu.vector_store %arg35[%c24_106, %c0_107], %143 {strides = array<i32>} : memref<32x16xf32, #tpu.memory_space<vmem>>, vector<8x16xf32>,
    %cst_108 = arith.constant dense<0.000000e+00> : vector<16xf32>
    %145 = vector.multi_reduction <add>, %139, %cst_108 [0] : vector<8x16xf32> to vector<16xf32>
    %146 = vector.shape_cast %145 : vector<16xf32> to vector<1x16xf32>
    %147 = arith.addf %123, %146 : vector<1x16xf32>
    %c0_109 = arith.constant 0 : index
    %c0_110 = arith.constant 0 : index
    %148 = vector.load %arg27[%c0_109, %c0_110] : memref<32x36xf32, #tpu.memory_space<vmem>>, vector<32x36xf32>
    %c0_111 = arith.constant 0 : index
    %c0_112 = arith.constant 0 : index
    %149 = vector.load %arg28[%c0_111, %c0_112] : memref<32x1xf32, #tpu.memory_space<vmem>>, vector<32x1xf32>
    %c0_113 = arith.constant 0 : index
    %c0_114 = arith.constant 0 : index
    %150 = vector.load %arg29[%c0_113, %c0_114] : memref<8x32xf32, #tpu.memory_space<vmem>>, vector<8x32xf32>
    %c0_115 = arith.constant 0 : index
    %c0_116 = arith.constant 0 : index
    %151 = vector.load %arg30[%c0_115, %c0_116] : memref<8x1xf32, #tpu.memory_space<vmem>>, vector<8x1xf32>
    %c24_117 = arith.constant 24 : index
    %c0_118 = arith.constant 0 : index
    %152 = vector.load %arg35[%c24_117, %c0_118] : memref<32x16xf32, #tpu.memory_space<vmem>>, vector<4x16xf32>
    %c28 = arith.constant 28 : index
    %c0_119 = arith.constant 0 : index
    %153 = vector.load %arg35[%c28, %c0_119] : memref<32x16xf32, #tpu.memory_space<vmem>>, vector<4x16xf32>
    %154 = tpu.concatenate %2, %152 in 0 : vector<32x16xf32>, vector<4x16xf32> -> vector<36x16xf32>
    %cst_120 = arith.constant dense<0.000000e+00> : vector<32x16xf32>
    %155 = tpu.matmul %148, %154, %cst_120 {dimension_numbers = #tpu.dot_dimension_numbers<[1], [0], [0], [1], [0, 0, 1, 1], [], []>} : vector<32x36xf32>, vector<36x16xf32>, vector<32x16xf32> -> vector<32x16xf32>
    %156 = vector.broadcast %149 : vector<32x1xf32> to vector<32x16xf32>
    %157 = arith.addf %155, %156 : vector<32x16xf32>
    %cst_121 = arith.constant 0.000000e+00 : f32
    %158 = vector.broadcast %cst_121 : f32 to vector<32x16xf32>
    %159 = arith.maximumf %157, %158 : vector<32x16xf32>
    %cst_122 = arith.constant dense<0.000000e+00> : vector<8x16xf32>
    %160 = tpu.matmul %150, %159, %cst_122 {dimension_numbers = #tpu.dot_dimension_numbers<[1], [0], [0], [1], [0, 0, 1, 1], [], []>} : vector<8x32xf32>, vector<32x16xf32>, vector<8x16xf32> -> vector<8x16xf32>
    %161 = vector.broadcast %151 : vector<8x1xf32> to vector<8x16xf32>
    %162 = arith.addf %160, %161 : vector<8x16xf32>
    %163 = vector.extract_strided_slice %162 {offsets = [0, 0], sizes = [4, 16], strides = [1, 1]} : vector<8x16xf32> to vector<4x16xf32>
    %164 = vector.extract_strided_slice %162 {offsets = [4, 0], sizes = [4, 16], strides = [1, 1]} : vector<8x16xf32> to vector<4x16xf32>
    %165 = math.exp %163 : vector<4x16xf32>
    %166 = arith.mulf %165, %153 : vector<4x16xf32>
    %167 = arith.addf %166, %164 : vector<4x16xf32>
    %c28_123 = arith.constant 28 : index
    %c0_124 = arith.constant 0 : index
    %168 = vector.load %arg35[%c28_123, %c0_124] : memref<32x16xf32, #tpu.memory_space<vmem>>, vector<4x16xf32>
    tpu.vector_store %arg35[%c28_123, %c0_124], %167 {strides = array<i32>} : memref<32x16xf32, #tpu.memory_space<vmem>>, vector<4x16xf32>,
    %cst_125 = arith.constant dense<0.000000e+00> : vector<16xf32>
    %169 = vector.multi_reduction <add>, %163, %cst_125 [0] : vector<4x16xf32> to vector<16xf32>
    %170 = vector.shape_cast %169 : vector<16xf32> to vector<1x16xf32>
    %171 = arith.addf %147, %170 : vector<1x16xf32>
    %c0_126 = arith.constant 0 : index
    %c0_127 = arith.constant 0 : index
    %172 = vector.load %arg31[%c0_126, %c0_127] : memref<32x36xf32, #tpu.memory_space<vmem>>, vector<32x36xf32>
    %c0_128 = arith.constant 0 : index
    %c0_129 = arith.constant 0 : index
    %173 = vector.load %arg32[%c0_128, %c0_129] : memref<32x1xf32, #tpu.memory_space<vmem>>, vector<32x1xf32>
    %c0_130 = arith.constant 0 : index
    %c0_131 = arith.constant 0 : index
    %174 = vector.load %arg33[%c0_130, %c0_131] : memref<8x32xf32, #tpu.memory_space<vmem>>, vector<8x32xf32>
    %c0_132 = arith.constant 0 : index
    %c0_133 = arith.constant 0 : index
    %175 = vector.load %arg34[%c0_132, %c0_133] : memref<8x1xf32, #tpu.memory_space<vmem>>, vector<8x1xf32>
    %c24_134 = arith.constant 24 : index
    %c0_135 = arith.constant 0 : index
    %176 = vector.load %arg35[%c24_134, %c0_135] : memref<32x16xf32, #tpu.memory_space<vmem>>, vector<4x16xf32>
    %c28_136 = arith.constant 28 : index
    %c0_137 = arith.constant 0 : index
    %177 = vector.load %arg35[%c28_136, %c0_137] : memref<32x16xf32, #tpu.memory_space<vmem>>, vector<4x16xf32>
    %178 = tpu.concatenate %2, %176 in 0 : vector<32x16xf32>, vector<4x16xf32> -> vector<36x16xf32>
    %cst_138 = arith.constant dense<0.000000e+00> : vector<32x16xf32>
    %179 = tpu.matmul %172, %178, %cst_138 {dimension_numbers = #tpu.dot_dimension_numbers<[1], [0], [0], [1], [0, 0, 1, 1], [], []>} : vector<32x36xf32>, vector<36x16xf32>, vector<32x16xf32> -> vector<32x16xf32>
    %180 = vector.broadcast %173 : vector<32x1xf32> to vector<32x16xf32>
    %181 = arith.addf %179, %180 : vector<32x16xf32>
    %cst_139 = arith.constant 0.000000e+00 : f32
    %182 = vector.broadcast %cst_139 : f32 to vector<32x16xf32>
    %183 = arith.maximumf %181, %182 : vector<32x16xf32>
    %cst_140 = arith.constant dense<0.000000e+00> : vector<8x16xf32>
    %184 = tpu.matmul %174, %183, %cst_140 {dimension_numbers = #tpu.dot_dimension_numbers<[1], [0], [0], [1], [0, 0, 1, 1], [], []>} : vector<8x32xf32>, vector<32x16xf32>, vector<8x16xf32> -> vector<8x16xf32>
    %185 = vector.broadcast %175 : vector<8x1xf32> to vector<8x16xf32>
    %186 = arith.addf %184, %185 : vector<8x16xf32>
    %187 = vector.extract_strided_slice %186 {offsets = [0, 0], sizes = [4, 16], strides = [1, 1]} : vector<8x16xf32> to vector<4x16xf32>
    %188 = vector.extract_strided_slice %186 {offsets = [4, 0], sizes = [4, 16], strides = [1, 1]} : vector<8x16xf32> to vector<4x16xf32>
    %189 = math.exp %187 : vector<4x16xf32>
    %190 = arith.mulf %189, %177 : vector<4x16xf32>
    %191 = arith.addf %190, %188 : vector<4x16xf32>
    %c28_141 = arith.constant 28 : index
    %c0_142 = arith.constant 0 : index
    %192 = vector.load %arg35[%c28_141, %c0_142] : memref<32x16xf32, #tpu.memory_space<vmem>>, vector<4x16xf32>
    tpu.vector_store %arg35[%c28_141, %c0_142], %191 {strides = array<i32>} : memref<32x16xf32, #tpu.memory_space<vmem>>, vector<4x16xf32>,
    %cst_143 = arith.constant dense<0.000000e+00> : vector<16xf32>
    %193 = vector.multi_reduction <add>, %187, %cst_143 [0] : vector<4x16xf32> to vector<16xf32>
    %194 = vector.shape_cast %193 : vector<16xf32> to vector<1x16xf32>
    %195 = arith.addf %171, %194 : vector<1x16xf32>
    %c0_144 = arith.constant 0 : index
    %c0_145 = arith.constant 0 : index
    %196 = vector.load %arg2[%c0_144, %c0_145] : memref<2x16xf32, #tpu.memory_space<vmem>>, vector<2x16xf32>
    %197 = vector.broadcast %195 : vector<1x16xf32> to vector<2x16xf32>
    %198 = arith.mulf %197, %196 : vector<2x16xf32>
    %cst_146 = arith.constant dense<0.000000e+00> : vector<2xf32>
    %199 = vector.multi_reduction <add>, %198, %cst_146 [1] : vector<2x16xf32> to vector<2xf32>
    %200 = vector.shape_cast %199 : vector<2xf32> to vector<2x1xf32>
    %c0_147 = arith.constant 0 : index
    %c0_148 = arith.constant 0 : index
    %201 = vector.load %arg36[%c0_147, %c0_148] : memref<2x1xf32, #tpu.memory_space<vmem>>, vector<2x1xf32>
    tpu.vector_store %arg36[%c0_147, %c0_148], %200 {strides = array<i32>} : memref<2x1xf32, #tpu.memory_space<vmem>>, vector<2x1xf32>,
    return
  }
}

</mosaic_0001>

<llo_original>
// kernel: flow_aff_forward.1
$region0: #{flow_aff_forward.1}
  #allocation0 [shape = 'u32[]', space=smem, size = 0x4, offset = 0x4, fixed_abs, tag = 'smem constant byte address 0x4 - core index']
  #allocation1 [shape = 'u32[72,128]{1,0:T(1,128)}', space=vmem, size = 0x9000, scoped, tag = 'internal scratch']
  %s0 = inlined_call_operand.smem [shape: u32[37], index: -1, kind: input, shape index: {}]
  %s1 = sld [smem:[%s0]]
  %s2 = scalar_lea.smem %s0, 1
  %s3 = sld [smem:[%s2]]
  %s4 = scalar_lea.smem %s0, 2
  %s5 = sld [smem:[%s4]]
  %s6 = scalar_lea.smem %s0, 3
  %s7 = sld [smem:[%s6]]
  %s8 = scalar_lea.smem %s0, 4
  %s9 = sld [smem:[%s8]]
  %s10 = scalar_lea.smem %s0, 5
  %s11 = sld [smem:[%s10]]
  %s12 = scalar_lea.smem %s0, 6
  %s13 = sld [smem:[%s12]]
  %s14 = scalar_lea.smem %s0, 7
  %s15 = sld [smem:[%s14]]
  %s16 = scalar_lea.smem %s0, 8
  %s17 = sld [smem:[%s16]]
  %s18 = scalar_lea.smem %s0, 9
  %s19 = sld [smem:[%s18]]
  %s20 = scalar_lea.smem %s0, 10
  %s21 = sld [smem:[%s20]]
  %s22 = scalar_lea.smem %s0, 11
  %s23 = sld [smem:[%s22]]
  %s24 = scalar_lea.smem %s0, 12
  %s25 = sld [smem:[%s24]]
  %s26 = scalar_lea.smem %s0, 13
  %s27 = sld [smem:[%s26]]
  %s28 = scalar_lea.smem %s0, 14
  %s29 = sld [smem:[%s28]]
  %s30 = scalar_lea.smem %s0, 15
  %s31 = sld [smem:[%s30]]
  %s32 = scalar_lea.smem %s0, 16
  %s33 = sld [smem:[%s32]]
  %s34 = scalar_lea.smem %s0, 17
  %s35 = sld [smem:[%s34]]
  %s36 = scalar_lea.smem %s0, 18
  %s37 = sld [smem:[%s36]]
  %s38 = scalar_lea.smem %s0, 19
  %s39 = sld [smem:[%s38]]
  %s40 = scalar_lea.smem %s0, 20
  %s41 = sld [smem:[%s40]]
  %s42 = scalar_lea.smem %s0, 21
  %s43 = sld [smem:[%s42]]
  %s44 = scalar_lea.smem %s0, 22
  %s45 = sld [smem:[%s44]]
  %s46 = scalar_lea.smem %s0, 23
  %s47 = sld [smem:[%s46]]
  %s48 = scalar_lea.smem %s0, 24
  %s49 = sld [smem:[%s48]]
  %s50 = scalar_lea.smem %s0, 25
  %s51 = sld [smem:[%s50]]
  %s52 = scalar_lea.smem %s0, 26
  %s53 = sld [smem:[%s52]]
  %s54 = scalar_lea.smem %s0, 27
  %s55 = sld [smem:[%s54]]
  %s56 = scalar_lea.smem %s0, 28
  %s57 = sld [smem:[%s56]]
  %s58 = scalar_lea.smem %s0, 29
  %s59 = sld [smem:[%s58]]
  %s60 = scalar_lea.smem %s0, 30
  %s61 = sld [smem:[%s60]]
  %s62 = scalar_lea.smem %s0, 31
  %s63 = sld [smem:[%s62]]
  %s64 = scalar_lea.smem %s0, 32
  %s65 = sld [smem:[%s64]]
  %s66 = scalar_lea.smem %s0, 33
  %s67 = sld [smem:[%s66]]
  %s68 = scalar_lea.smem %s0, 34
  %s69 = sld [smem:[%s68]]
  %s70 = scalar_lea.smem %s0, 35
  %s71 = sld [smem:[%s70]]
  %s72 = scalar_lea.smem %s0, 36
  %s73 = sld [smem:[%s72]]
  %74 = xla_tuple %s71, %s73
  %s75 = sld [smem:[#allocation0]]
  $region158: #{flow_aff_forward.1} parent=0
    _
  %s77 = ssub.s32 1, %s75
  %s78 = scalar_select 0, %s77, %s75
  // Predicated region
  $region2: #{flow_aff_forward.1} parent=0 // pred_check
    _
  $region3: #{flow_aff_forward.1} parent=0 // pred_check_branch
    %80 = sbr.rel (0) target = $region5
  $region4: #{flow_aff_forward.1} parent=0 // pred_region
    _
  $region5: #{flow_aff_forward.1} parent=0 // pred_fallthru
    _
  // Predicated region
  $region6: #{flow_aff_forward.1} parent=0 // pred_check
    _
  $region7: #{flow_aff_forward.1} parent=0 // pred_check_branch
    %82 = sbr.rel (0) target = $region9
  $region8: #{flow_aff_forward.1} parent=0 // pred_region
    _
  $region9: #{flow_aff_forward.1} parent=0 // pred_fallthru
    _
  // Predicated region
  $region10: #{flow_aff_forward.1} parent=0 // pred_check
    _
  $region11: #{flow_aff_forward.1} parent=0 // pred_check_branch
    %84 = sbr.rel (0) target = $region13
  $region12: #{flow_aff_forward.1} parent=0 // pred_region
    _
  $region13: #{flow_aff_forward.1} parent=0 // pred_fallthru
    _
  // Predicated region
  $region14: #{flow_aff_forward.1} parent=0 // pred_check
    _
  $region15: #{flow_aff_forward.1} parent=0 // pred_check_branch
    %86 = sbr.rel (0) target = $region17
  $region16: #{flow_aff_forward.1} parent=0 // pred_region
    _
  $region17: #{flow_aff_forward.1} parent=0 // pred_fallthru
    _
  // Predicated region
  $region18: #{flow_aff_forward.1} parent=0 // pred_check
    _
  $region19: #{flow_aff_forward.1} parent=0 // pred_check_branch
    %88 = sbr.rel (0) target = $region21
  $region20: #{flow_aff_forward.1} parent=0 // pred_region
    _
  $region21: #{flow_aff_forward.1} parent=0 // pred_fallthru
    _
  // Predicated region
  $region22: #{flow_aff_forward.1} parent=0 // pred_check
    _
  $region23: #{flow_aff_forward.1} parent=0 // pred_check_branch
    %90 = sbr.rel (0) target = $region25
  $region24: #{flow_aff_forward.1} parent=0 // pred_region
    _
  $region25: #{flow_aff_forward.1} parent=0 // pred_fallthru
    _
  // Predicated region
  $region26: #{flow_aff_forward.1} parent=0 // pred_check
    _
  $region27: #{flow_aff_forward.1} parent=0 // pred_check_branch
    %92 = sbr.rel (0) target = $region29
  $region28: #{flow_aff_forward.1} parent=0 // pred_region
    _
  $region29: #{flow_aff_forward.1} parent=0 // pred_fallthru
    _
  // Predicated region
  $region30: #{flow_aff_forward.1} parent=0 // pred_check
    _
  $region31: #{flow_aff_forward.1} parent=0 // pred_check_branch
    %94 = sbr.rel (0) target = $region33
  $region32: #{flow_aff_forward.1} parent=0 // pred_region
    _
  $region33: #{flow_aff_forward.1} parent=0 // pred_fallthru
    _
  // Predicated region
  $region34: #{flow_aff_forward.1} parent=0 // pred_check
    _
  $region35: #{flow_aff_forward.1} parent=0 // pred_check_branch
    %96 = sbr.rel (0) target = $region37
  $region36: #{flow_aff_forward.1} parent=0 // pred_region
    _
  $region37: #{flow_aff_forward.1} parent=0 // pred_fallthru
    _
  // Predicated region
  $region38: #{flow_aff_forward.1} parent=0 // pred_check
    _
  $region39: #{flow_aff_forward.1} parent=0 // pred_check_branch
    %98 = sbr.rel (0) target = $region41
  $region40: #{flow_aff_forward.1} parent=0 // pred_region
    _
  $region41: #{flow_aff_forward.1} parent=0 // pred_fallthru
    _
  // Predicated region
  $region42: #{flow_aff_forward.1} parent=0 // pred_check
    _
  $region43: #{flow_aff_forward.1} parent=0 // pred_check_branch
    %100 = sbr.rel (0) target = $region45
  $region44: #{flow_aff_forward.1} parent=0 // pred_region
    _
  $region45: #{flow_aff_forward.1} parent=0 // pred_fallthru
    _
  // Predicated region
  $region46: #{flow_aff_forward.1} parent=0 // pred_check
    _
  $region47: #{flow_aff_forward.1} parent=0 // pred_check_branch
    %102 = sbr.rel (0) target = $region49
  $region48: #{flow_aff_forward.1} parent=0 // pred_region
    _
  $region49: #{flow_aff_forward.1} parent=0 // pred_fallthru
    _
  // Predicated region
  $region50: #{flow_aff_forward.1} parent=0 // pred_check
    _
  $region51: #{flow_aff_forward.1} parent=0 // pred_check_branch
    %104 = sbr.rel (0) target = $region53
  $region52: #{flow_aff_forward.1} parent=0 // pred_region
    _
  $region53: #{flow_aff_forward.1} parent=0 // pred_fallthru
    _
  // Predicated region
  $region54: #{flow_aff_forward.1} parent=0 // pred_check
    _
  $region55: #{flow_aff_forward.1} parent=0 // pred_check_branch
    %106 = sbr.rel (0) target = $region57
  $region56: #{flow_aff_forward.1} parent=0 // pred_region
    _
  $region57: #{flow_aff_forward.1} parent=0 // pred_fallthru
    _
  // Predicated region
  $region58: #{flow_aff_forward.1} parent=0 // pred_check
    _
  $region59: #{flow_aff_forward.1} parent=0 // pred_check_branch
    %108 = sbr.rel (0) target = $region61
  $region60: #{flow_aff_forward.1} parent=0 // pred_region
    _
  $region61: #{flow_aff_forward.1} parent=0 // pred_fallthru
    _
  // Predicated region
  $region62: #{flow_aff_forward.1} parent=0 // pred_check
    _
  $region63: #{flow_aff_forward.1} parent=0 // pred_check_branch
    %110 = sbr.rel (0) target = $region65
  $region64: #{flow_aff_forward.1} parent=0 // pred_region
    _
  $region65: #{flow_aff_forward.1} parent=0 // pred_fallthru
    _
  // Predicated region
  $region66: #{flow_aff_forward.1} parent=0 // pred_check
    _
  $region67: #{flow_aff_forward.1} parent=0 // pred_check_branch
    %112 = sbr.rel (0) target = $region69
  $region68: #{flow_aff_forward.1} parent=0 // pred_region
    _
  $region69: #{flow_aff_forward.1} parent=0 // pred_fallthru
    _
  // Predicated region
  $region70: #{flow_aff_forward.1} parent=0 // pred_check
    _
  $region71: #{flow_aff_forward.1} parent=0 // pred_check_branch
    %114 = sbr.rel (0) target = $region73
  $region72: #{flow_aff_forward.1} parent=0 // pred_region
    _
  $region73: #{flow_aff_forward.1} parent=0 // pred_fallthru
    _
  // Predicated region
  $region74: #{flow_aff_forward.1} parent=0 // pred_check
    _
  $region75: #{flow_aff_forward.1} parent=0 // pred_check_branch
    %116 = sbr.rel (0) target = $region77
  $region76: #{flow_aff_forward.1} parent=0 // pred_region
    _
  $region77: #{flow_aff_forward.1} parent=0 // pred_fallthru
    _
  // Predicated region
  $region78: #{flow_aff_forward.1} parent=0 // pred_check
    _
  $region79: #{flow_aff_forward.1} parent=0 // pred_check_branch
    %118 = sbr.rel (0) target = $region81
  $region80: #{flow_aff_forward.1} parent=0 // pred_region
    _
  $region81: #{flow_aff_forward.1} parent=0 // pred_fallthru
    _
  // Predicated region
  $region82: #{flow_aff_forward.1} parent=0 // pred_check
    _
  $region83: #{flow_aff_forward.1} parent=0 // pred_check_branch
    %120 = sbr.rel (0) target = $region85
  $region84: #{flow_aff_forward.1} parent=0 // pred_region
    _
  $region85: #{flow_aff_forward.1} parent=0 // pred_fallthru
    _
  // Predicated region
  $region86: #{flow_aff_forward.1} parent=0 // pred_check
    _
  $region87: #{flow_aff_forward.1} parent=0 // pred_check_branch
    %122 = sbr.rel (0) target = $region89
  $region88: #{flow_aff_forward.1} parent=0 // pred_region
    _
  $region89: #{flow_aff_forward.1} parent=0 // pred_fallthru
    _
  // Predicated region
  $region90: #{flow_aff_forward.1} parent=0 // pred_check
    _
  $region91: #{flow_aff_forward.1} parent=0 // pred_check_branch
    %124 = sbr.rel (0) target = $region93
  $region92: #{flow_aff_forward.1} parent=0 // pred_region
    _
  $region93: #{flow_aff_forward.1} parent=0 // pred_fallthru
    _
  // Predicated region
  $region94: #{flow_aff_forward.1} parent=0 // pred_check
    _
  $region95: #{flow_aff_forward.1} parent=0 // pred_check_branch
    %126 = sbr.rel (0) target = $region97
  $region96: #{flow_aff_forward.1} parent=0 // pred_region
    _
  $region97: #{flow_aff_forward.1} parent=0 // pred_fallthru
    _
  // Predicated region
  $region98: #{flow_aff_forward.1} parent=0 // pred_check
    _
  $region99: #{flow_aff_forward.1} parent=0 // pred_check_branch
    %128 = sbr.rel (0) target = $region101
  $region100: #{flow_aff_forward.1} parent=0 // pred_region
    _
  $region101: #{flow_aff_forward.1} parent=0 // pred_fallthru
    _
  // Predicated region
  $region102: #{flow_aff_forward.1} parent=0 // pred_check
    _
  $region103: #{flow_aff_forward.1} parent=0 // pred_check_branch
    %130 = sbr.rel (0) target = $region105
  $region104: #{flow_aff_forward.1} parent=0 // pred_region
    _
  $region105: #{flow_aff_forward.1} parent=0 // pred_fallthru
    _
  // Predicated region
  $region106: #{flow_aff_forward.1} parent=0 // pred_check
    _
  $region107: #{flow_aff_forward.1} parent=0 // pred_check_branch
    %132 = sbr.rel (0) target = $region109
  $region108: #{flow_aff_forward.1} parent=0 // pred_region
    _
  $region109: #{flow_aff_forward.1} parent=0 // pred_fallthru
    _
  // Predicated region
  $region110: #{flow_aff_forward.1} parent=0 // pred_check
    _
  $region111: #{flow_aff_forward.1} parent=0 // pred_check_branch
    %134 = sbr.rel (0) target = $region113
  $region112: #{flow_aff_forward.1} parent=0 // pred_region
    _
  $region113: #{flow_aff_forward.1} parent=0 // pred_fallthru
    _
  // Predicated region
  $region114: #{flow_aff_forward.1} parent=0 // pred_check
    _
  $region115: #{flow_aff_forward.1} parent=0 // pred_check_branch
    %136 = sbr.rel (0) target = $region117
  $region116: #{flow_aff_forward.1} parent=0 // pred_region
    _
  $region117: #{flow_aff_forward.1} parent=0 // pred_fallthru
    _
  // Predicated region
  $region118: #{flow_aff_forward.1} parent=0 // pred_check
    _
  $region119: #{flow_aff_forward.1} parent=0 // pred_check_branch
    %138 = sbr.rel (0) target = $region121
  $region120: #{flow_aff_forward.1} parent=0 // pred_region
    _
  $region121: #{flow_aff_forward.1} parent=0 // pred_fallthru
    _
  // Predicated region
  $region122: #{flow_aff_forward.1} parent=0 // pred_check
    _
  $region123: #{flow_aff_forward.1} parent=0 // pred_check_branch
    %140 = sbr.rel (0) target = $region125
  $region124: #{flow_aff_forward.1} parent=0 // pred_region
    _
  $region125: #{flow_aff_forward.1} parent=0 // pred_fallthru
    _
  // Predicated region
  $region126: #{flow_aff_forward.1} parent=0 // pred_check
    _
  $region127: #{flow_aff_forward.1} parent=0 // pred_check_branch
    %142 = sbr.rel (0) target = $region129
  $region128: #{flow_aff_forward.1} parent=0 // pred_region
    _
  $region129: #{flow_aff_forward.1} parent=0 // pred_fallthru
    _
  // Predicated region
  $region130: #{flow_aff_forward.1} parent=0 // pred_check
    _
  $region131: #{flow_aff_forward.1} parent=0 // pred_check_branch
    %144 = sbr.rel (0) target = $region133
  $region132: #{flow_aff_forward.1} parent=0 // pred_region
    _
  $region133: #{flow_aff_forward.1} parent=0 // pred_fallthru
    _
  // Predicated region
  $region134: #{flow_aff_forward.1} parent=0 // pred_check
    _
  $region135: #{flow_aff_forward.1} parent=0 // pred_check_branch
    %146 = sbr.rel (0) target = $region137
  $region136: #{flow_aff_forward.1} parent=0 // pred_region
    _
  $region137: #{flow_aff_forward.1} parent=0 // pred_fallthru
    _
  // Predicated region
  $region138: #{flow_aff_forward.1} parent=0 // pred_check
    _
  $region139: #{flow_aff_forward.1} parent=0 // pred_check_branch
    %148 = sbr.rel (0) target = $region141
  $region140: #{flow_aff_forward.1} parent=0 // pred_region
    _
  $region141: #{flow_aff_forward.1} parent=0 // pred_fallthru
    _
  %v149 = vld [vmem:[%s1] sm:$0xff]
  %v150 = vld [vmem:[%s1 + $0x8] sm:$0xff]
  %v151 = vld [vmem:[%s1 + $0x10] sm:$0xff]
  %v152 = vld [vmem:[%s1 + $0x18] sm:$0xff]
  %vm153 = vcmask 130048
  %154 = vst.msk [vmem:[%s71] sm:$0xff] %vm153, %v149
  %155 = vst.msk [vmem:[%s71 + $0x8] sm:$0xff] %vm153, %v150
  %156 = vst.msk [vmem:[%s71 + $0x10] sm:$0xff] %vm153, %v151
  %157 = vst.msk [vmem:[%s71 + $0x18] sm:$0xff] %vm153, %v152
  %v158 = vld [vmem:[%s3] sm:$0xff]
  %v159 = vld [vmem:[%s3 + $0x8] sm:$0xff]
  %v160 = vld [vmem:[%s3 + $0x10] sm:$0xff]
  %v161 = vld [vmem:[%s3 + $0x18] sm:$0xff]
  %v162 = vld [vmem:[%s7] sm:$0xff]
  %v163 = vld [vmem:[%s7 + $0x8] sm:$0xff]
  %v164 = vld [vmem:[%s7 + $0x10] sm:$0xff]
  %v165 = vld [vmem:[%s7 + $0x18] sm:$0xff]
  %v166 = vld [vmem:[%s9] sm:$0xff]
  %v167 = vld [vmem:[%s9 + $0x8] sm:$0xff]
  %v168 = vld [vmem:[%s9 + $0x10] sm:$0xff]
  %v169 = vld [vmem:[%s9 + $0x18] sm:$0xff]
  %v170 = vld [vmem:[%s11] sm:$0xff]
  %v171 = vld [vmem:[%s11 + $0x8] sm:$0xff]
  %v172 = vld [vmem:[%s11 + $0x10] sm:$0xff]
  %v173 = vld [vmem:[%s11 + $0x18] sm:$0xff]
  %v174 = vld [vmem:[%s13] sm:$0xff]
  %v175 = vld [vmem:[%s13 + $0x8] sm:$0xff]
  %v176 = vld [vmem:[%s13 + $0x10] sm:$0xff]
  %v177 = vld [vmem:[%s13 + $0x18] sm:$0xff]
  %v178 = vld [vmem:[%s71] sm:$0xff]
  %v179 = vld [vmem:[%s71 + $0x8] sm:$0xff]
  %v180 = vld [vmem:[%s71 + $0x10] sm:$0xff]
  %v181 = vld [vmem:[%s71 + $0x18] sm:$0xff]
  %183 = vset.pattern.permute.xlu0 0
  %184 = vperm.xlu0 %183, %v166
  %v185 = vpop.permute.xlu0 %184
  %188 = vset.pattern.permute.xlu0 0
  %189 = vperm.xlu0 %188, %v167
  %v190 = vpop.permute.xlu0 %189
  %193 = vset.pattern.permute.xlu0 0
  %194 = vperm.xlu0 %193, %v168
  %v195 = vpop.permute.xlu0 %194
  %198 = vset.pattern.permute.xlu0 0
  %199 = vperm.xlu0 %198, %v169
  %v200 = vpop.permute.xlu0 %199
  %vm202 = vcmask 392192
  %v204 = vsel %vm202, %v162, 0
  %v207 = vsel %vm202, %v163, 0
  %v210 = vsel %vm202, %v164, 0
  %v213 = vsel %vm202, %v165, 0
  %215 = vmatpush.msra.mxu0 0.0
  %216 = vmatpush.msra.mxu0 0.0
  %217 = vmatpush.msra.mxu0 0.0
  %218 = vmatpush.msra.mxu0 0.0
  %219 = vmatpush.msra.mxu0 0.0
  %220 = vmatpush.msra.mxu0 0.0
  %221 = vmatpush.msra.mxu0 0.0
  %222 = vmatpush.msra.mxu0 0.0
  %223 = vmatpush.msra.mxu0 0.0
  %224 = vmatpush.msra.mxu0 0.0
  %225 = vmatpush.msra.mxu0 %v179
  %226 = vmatpush.msra.mxu0 %v178
  %227 = vmatpush.msra.mxu0 %v161
  %228 = vmatpush.msra.mxu0 %v160
  %229 = vmatpush.msra.mxu0 %v159
  %230 = vmatpush.msra.mxu0 %v158
  %231 = vmatmul.f32.gmra.mxu0 %v204
  %v232 = vpop.f32.mrf.mxu0
  %v233 = vadd.f32 %v185, %v232
  %234 = vmatmul.f32.gmra.mxu0 %v207
  %v235 = vpop.f32.mrf.mxu0
  %v236 = vadd.f32 %v190, %v235
  %237 = vmatmul.f32.gmra.mxu0 %v210
  %v238 = vpop.f32.mrf.mxu0
  %v239 = vadd.f32 %v195, %v238
  %240 = vmatmul.f32.gmra.mxu0 %v213
  %v241 = vpop.f32.mrf.mxu0
  %v242 = vadd.f32 %v200, %v241
  %243 = vdwg.mxu0
  %v244 = vmax.f32 %v233, 0.0
  %v245 = vmax.f32 %v236, 0.0
  %v246 = vmax.f32 %v239, 0.0
  %v247 = vmax.f32 %v242, 0.0
  %249 = vset.pattern.permute.xlu0 0
  %250 = vperm.xlu0 %249, %v174
  %v251 = vpop.permute.xlu0 %250
  %254 = vset.pattern.permute.xlu0 0
  %255 = vperm.xlu0 %254, %v175
  %v256 = vpop.permute.xlu0 %255
  %259 = vset.pattern.permute.xlu0 0
  %260 = vperm.xlu0 %259, %v176
  %v261 = vpop.permute.xlu0 %260
  %264 = vset.pattern.permute.xlu0 0
  %265 = vperm.xlu0 %264, %v177
  %v266 = vpop.permute.xlu0 %265
  %vm268 = vcmask 261120
  %v270 = vsel %vm268, %v170, 0
  %v273 = vsel %vm268, %v171, 0
  %v276 = vsel %vm268, %v172, 0
  %v279 = vsel %vm268, %v173, 0
  %281 = vmatpush.msra.mxu0 0.0
  %282 = vmatpush.msra.mxu0 0.0
  %283 = vmatpush.msra.mxu0 0.0
  %284 = vmatpush.msra.mxu0 0.0
  %285 = vmatpush.msra.mxu0 0.0
  %286 = vmatpush.msra.mxu0 0.0
  %287 = vmatpush.msra.mxu0 0.0
  %288 = vmatpush.msra.mxu0 0.0
  %289 = vmatpush.msra.mxu0 0.0
  %290 = vmatpush.msra.mxu0 0.0
  %291 = vmatpush.msra.mxu0 0.0
  %292 = vmatpush.msra.mxu0 0.0
  %293 = vmatpush.msra.mxu0 %v247
  %294 = vmatpush.msra.mxu0 %v246
  %295 = vmatpush.msra.mxu0 %v245
  %296 = vmatpush.msra.mxu0 %v244
  %297 = vmatmul.f32.gmra.mxu0 %v270
  %v298 = vpop.f32.mrf.mxu0
  %v299 = vadd.f32 %v251, %v298
  %300 = vmatmul.f32.gmra.mxu0 %v273
  %v301 = vpop.f32.mrf.mxu0
  %v302 = vadd.f32 %v256, %v301
  %303 = vmatmul.f32.gmra.mxu0 %v276
  %v304 = vpop.f32.mrf.mxu0
  %v305 = vadd.f32 %v261, %v304
  %306 = vmatmul.f32.gmra.mxu0 %v279
  %v307 = vpop.f32.mrf.mxu0
  %v308 = vadd.f32 %v266, %v307
  %309 = vdwg.mxu0
  %v310 = vmul.f32 %v299, 1.442695
  %v311 = vpow.pop %v310
  %v312 = vmul.f32 %v302, 1.442695
  %v313 = vpow.pop %v312
  %v314 = vmul.f32 %v311, %v180
  %v315 = vmul.f32 %v313, %v181
  %v316 = vadd.f32 %v314, %v305
  %v317 = vadd.f32 %v315, %v308
  %318 = vst.msk [vmem:[%s71 + $0x10] sm:$0xff] %vm153, %v316
  %319 = vst.msk [vmem:[%s71 + $0x18] sm:$0xff] %vm153, %v317
  %v320 = vsel %vm153, %v299, 0.0
  %v321 = vsel %vm153, %v302, 0.0
  %v322 = vadd.f32 %v320, %v321
  %v323 = vrot.slane %v322, 4
  %v324 = vadd.f32 %v322, %v323
  %v325 = vrot.slane %v324, 2
  %v326 = vadd.f32 %v324, %v325
  %v327 = vrot.slane %v326, 1
  %v328 = vadd.f32 %v326, %v327
  %v329 = vadd.f32 %v328, 0.0
  %v330 = vld [vmem:[%s15] sm:$0xff]
  %v331 = vld [vmem:[%s15 + $0x8] sm:$0xff]
  %v332 = vld [vmem:[%s15 + $0x10] sm:$0xff]
  %v333 = vld [vmem:[%s15 + $0x18] sm:$0xff]
  %v334 = vld [vmem:[%s17] sm:$0xff]
  %v335 = vld [vmem:[%s17 + $0x8] sm:$0xff]
  %v336 = vld [vmem:[%s17 + $0x10] sm:$0xff]
  %v337 = vld [vmem:[%s17 + $0x18] sm:$0xff]
  %v338 = vld [vmem:[%s19] sm:$0xff]
  %v339 = vld [vmem:[%s19 + $0x8] sm:$0xff]
  %v340 = vld [vmem:[%s19 + $0x10] sm:$0xff]
  %v341 = vld [vmem:[%s19 + $0x18] sm:$0xff]
  %v342 = vld [vmem:[%s21] sm:$0xff]
  %v343 = vld [vmem:[%s21 + $0x8] sm:$0xff]
  %v344 = vld [vmem:[%s21 + $0x10] sm:$0xff]
  %v345 = vld [vmem:[%s21 + $0x18] sm:$0xff]
  %v346 = vld [vmem:[%s71] sm:$0xff]
  %v347 = vld [vmem:[%s71 + $0x8] sm:$0xff]
  %v348 = vld [vmem:[%s71 + $0x10] sm:$0xff]
  %v349 = vld [vmem:[%s71 + $0x18] sm:$0xff]
  %351 = vset.pattern.permute.xlu0 0
  %352 = vperm.xlu0 %351, %v334
  %v353 = vpop.permute.xlu0 %352
  %356 = vset.pattern.permute.xlu0 0
  %357 = vperm.xlu0 %356, %v335
  %v358 = vpop.permute.xlu0 %357
  %361 = vset.pattern.permute.xlu0 0
  %362 = vperm.xlu0 %361, %v336
  %v363 = vpop.permute.xlu0 %362
  %366 = vset.pattern.permute.xlu0 0
  %367 = vperm.xlu0 %366, %v337
  %v368 = vpop.permute.xlu0 %367
  %v371 = vsel %vm202, %v330, 0
  %v374 = vsel %vm202, %v331, 0
  %v377 = vsel %vm202, %v332, 0
  %v380 = vsel %vm202, %v333, 0
  %382 = vmatpush.msra.mxu0 0.0
  %383 = vmatpush.msra.mxu0 0.0
  %384 = vmatpush.msra.mxu0 0.0
  %385 = vmatpush.msra.mxu0 0.0
  %386 = vmatpush.msra.mxu0 0.0
  %387 = vmatpush.msra.mxu0 0.0
  %388 = vmatpush.msra.mxu0 0.0
  %389 = vmatpush.msra.mxu0 0.0
  %390 = vmatpush.msra.mxu0 0.0
  %391 = vmatpush.msra.mxu0 0.0
  %392 = vmatpush.msra.mxu0 %v347
  %393 = vmatpush.msra.mxu0 %v346
  %394 = vmatpush.msra.mxu0 %v161
  %395 = vmatpush.msra.mxu0 %v160
  %396 = vmatpush.msra.mxu0 %v159
  %397 = vmatpush.msra.mxu0 %v158
  %398 = vmatmul.f32.gmra.mxu0 %v371
  %v399 = vpop.f32.mrf.mxu0
  %v400 = vadd.f32 %v353, %v399
  %401 = vmatmul.f32.gmra.mxu0 %v374
  %v402 = vpop.f32.mrf.mxu0
  %v403 = vadd.f32 %v358, %v402
  %404 = vmatmul.f32.gmra.mxu0 %v377
  %v405 = vpop.f32.mrf.mxu0
  %v406 = vadd.f32 %v363, %v405
  %407 = vmatmul.f32.gmra.mxu0 %v380
  %v408 = vpop.f32.mrf.mxu0
  %v409 = vadd.f32 %v368, %v408
  %410 = vdwg.mxu0
  %v411 = vmax.f32 %v400, 0.0
  %v412 = vmax.f32 %v403, 0.0
  %v413 = vmax.f32 %v406, 0.0
  %v414 = vmax.f32 %v409, 0.0
  %416 = vset.pattern.permute.xlu0 0
  %417 = vperm.xlu0 %416, %v342
  %v418 = vpop.permute.xlu0 %417
  %421 = vset.pattern.permute.xlu0 0
  %422 = vperm.xlu0 %421, %v343
  %v423 = vpop.permute.xlu0 %422
  %426 = vset.pattern.permute.xlu0 0
  %427 = vperm.xlu0 %426, %v344
  %v428 = vpop.permute.xlu0 %427
  %431 = vset.pattern.permute.xlu0 0
  %432 = vperm.xlu0 %431, %v345
  %v433 = vpop.permute.xlu0 %432
  %v436 = vsel %vm268, %v338, 0
  %v439 = vsel %vm268, %v339, 0
  %v442 = vsel %vm268, %v340, 0
  %v445 = vsel %vm268, %v341, 0
  %447 = vmatpush.msra.mxu0 0.0
  %448 = vmatpush.msra.mxu0 0.0
  %449 = vmatpush.msra.mxu0 0.0
  %450 = vmatpush.msra.mxu0 0.0
  %451 = vmatpush.msra.mxu0 0.0
  %452 = vmatpush.msra.mxu0 0.0
  %453 = vmatpush.msra.mxu0 0.0
  %454 = vmatpush.msra.mxu0 0.0
  %455 = vmatpush.msra.mxu0 0.0
  %456 = vmatpush.msra.mxu0 0.0
  %457 = vmatpush.msra.mxu0 0.0
  %458 = vmatpush.msra.mxu0 0.0
  %459 = vmatpush.msra.mxu0 %v414
  %460 = vmatpush.msra.mxu0 %v413
  %461 = vmatpush.msra.mxu0 %v412
  %462 = vmatpush.msra.mxu0 %v411
  %463 = vmatmul.f32.gmra.mxu0 %v436
  %v464 = vpop.f32.mrf.mxu0
  %v465 = vadd.f32 %v418, %v464
  %466 = vmatmul.f32.gmra.mxu0 %v439
  %v467 = vpop.f32.mrf.mxu0
  %v468 = vadd.f32 %v423, %v467
  %469 = vmatmul.f32.gmra.mxu0 %v442
  %v470 = vpop.f32.mrf.mxu0
  %v471 = vadd.f32 %v428, %v470
  %472 = vmatmul.f32.gmra.mxu0 %v445
  %v473 = vpop.f32.mrf.mxu0
  %v474 = vadd.f32 %v433, %v473
  %475 = vdwg.mxu0
  %v476 = vmul.f32 %v465, 1.442695
  %v477 = vpow.pop %v476
  %v478 = vmul.f32 %v468, 1.442695
  %v479 = vpow.pop %v478
  %v480 = vmul.f32 %v477, %v348
  %v481 = vmul.f32 %v479, %v349
  %v482 = vadd.f32 %v480, %v471
  %v483 = vadd.f32 %v481, %v474
  %484 = vst.msk [vmem:[%s71 + $0x10] sm:$0xff] %vm153, %v482
  %485 = vst.msk [vmem:[%s71 + $0x18] sm:$0xff] %vm153, %v483
  %v486 = vsel %vm153, %v465, 0.0
  %v487 = vsel %vm153, %v468, 0.0
  %v488 = vadd.f32 %v486, %v487
  %v489 = vrot.slane %v488, 4
  %v490 = vadd.f32 %v488, %v489
  %v491 = vrot.slane %v490, 2
  %v492 = vadd.f32 %v490, %v491
  %v493 = vrot.slane %v492, 1
  %v494 = vadd.f32 %v492, %v493
  %v495 = vadd.f32 %v329, %v494
  %v496 = vld [vmem:[%s23] sm:$0xff]
  %v497 = vld [vmem:[%s23 + $0x8] sm:$0xff]
  %v498 = vld [vmem:[%s23 + $0x10] sm:$0xff]
  %v499 = vld [vmem:[%s23 + $0x18] sm:$0xff]
  %v500 = vld [vmem:[%s25] sm:$0xff]
  %v501 = vld [vmem:[%s25 + $0x8] sm:$0xff]
  %v502 = vld [vmem:[%s25 + $0x10] sm:$0xff]
  %v503 = vld [vmem:[%s25 + $0x18] sm:$0xff]
  %v504 = vld [vmem:[%s27] sm:$0xff]
  %v505 = vld [vmem:[%s27 + $0x8] sm:$0xff]
  %v506 = vld [vmem:[%s27 + $0x10] sm:$0xff]
  %v507 = vld [vmem:[%s29] sm:$0xff]
  %v508 = vld [vmem:[%s29 + $0x8] sm:$0xff]
  %v509 = vld [vmem:[%s29 + $0x10] sm:$0xff]
  %v510 = vld [vmem:[%s71 + $0x8] sm:$0xff]
  %v511 = vld [vmem:[%s71 + $0x10] sm:$0xf]
  %v512 = vld [vmem:[%s71 + $0x14] sm:$0xff]
  %v513 = vld [vmem:[%s71 + $0x1c] sm:$0xf]
  %515 = vset.pattern.permute.xlu0 0
  %516 = vperm.xlu0 %515, %v500
  %v517 = vpop.permute.xlu0 %516
  %520 = vset.pattern.permute.xlu0 0
  %521 = vperm.xlu0 %520, %v501
  %v522 = vpop.permute.xlu0 %521
  %525 = vset.pattern.permute.xlu0 0
  %526 = vperm.xlu0 %525, %v502
  %v527 = vpop.permute.xlu0 %526
  %530 = vset.pattern.permute.xlu0 0
  %531 = vperm.xlu0 %530, %v503
  %v532 = vpop.permute.xlu0 %531
  %vm534 = vcmask 359424
  %v536 = vsel %vm534, %v496, 0
  %v539 = vsel %vm534, %v497, 0
  %v542 = vsel %vm534, %v498, 0
  %v545 = vsel %vm534, %v499, 0
  %vm547 = vcmask 1043456
  %v549 = vsel %vm547, %v511, 0
  %551 = vmatpush.msra.mxu0 0.0
  %552 = vmatpush.msra.mxu0 0.0
  %553 = vmatpush.msra.mxu0 0.0
  %554 = vmatpush.msra.mxu0 0.0
  %555 = vmatpush.msra.mxu0 0.0
  %556 = vmatpush.msra.mxu0 0.0
  %557 = vmatpush.msra.mxu0 0.0
  %558 = vmatpush.msra.mxu0 0.0
  %559 = vmatpush.msra.mxu0 0.0
  %560 = vmatpush.msra.mxu0 0.0
  %561 = vmatpush.msra.mxu0 %v549
  %562 = vmatpush.msra.mxu0 %v510
  %563 = vmatpush.msra.mxu0 %v161
  %564 = vmatpush.msra.mxu0 %v160
  %565 = vmatpush.msra.mxu0 %v159
  %566 = vmatpush.msra.mxu0 %v158
  %567 = vmatmul.f32.gmra.mxu0 %v536
  %v568 = vpop.f32.mrf.mxu0
  %v569 = vadd.f32 %v517, %v568
  %570 = vmatmul.f32.gmra.mxu0 %v539
  %v571 = vpop.f32.mrf.mxu0
  %v572 = vadd.f32 %v522, %v571
  %573 = vmatmul.f32.gmra.mxu0 %v542
  %v574 = vpop.f32.mrf.mxu0
  %v575 = vadd.f32 %v527, %v574
  %576 = vmatmul.f32.gmra.mxu0 %v545
  %v577 = vpop.f32.mrf.mxu0
  %v578 = vadd.f32 %v532, %v577
  %579 = vdwg.mxu0
  %v580 = vmax.f32 %v569, 0.0
  %v581 = vmax.f32 %v572, 0.0
  %v582 = vmax.f32 %v575, 0.0
  %v583 = vmax.f32 %v578, 0.0
  %585 = vset.pattern.permute.xlu0 0
  %586 = vperm.xlu0 %585, %v507
  %v587 = vpop.permute.xlu0 %586
  %590 = vset.pattern.permute.xlu0 0
  %591 = vperm.xlu0 %590, %v508
  %v592 = vpop.permute.xlu0 %591
  %595 = vset.pattern.permute.xlu0 0
  %596 = vperm.xlu0 %595, %v509
  %v597 = vpop.permute.xlu0 %596
  %v600 = vsel %vm268, %v504, 0
  %v603 = vsel %vm268, %v505, 0
  %v606 = vsel %vm268, %v506, 0
  %608 = vmatpush.msra.mxu0 0.0
  %609 = vmatpush.msra.mxu0 0.0
  %610 = vmatpush.msra.mxu0 0.0
  %611 = vmatpush.msra.mxu0 0.0
  %612 = vmatpush.msra.mxu0 0.0
  %613 = vmatpush.msra.mxu0 0.0
  %614 = vmatpush.msra.mxu0 0.0
  %615 = vmatpush.msra.mxu0 0.0
  %616 = vmatpush.msra.mxu0 0.0
  %617 = vmatpush.msra.mxu0 0.0
  %618 = vmatpush.msra.mxu0 0.0
  %619 = vmatpush.msra.mxu0 0.0
  %620 = vmatpush.msra.mxu0 %v583
  %621 = vmatpush.msra.mxu0 %v582
  %622 = vmatpush.msra.mxu0 %v581
  %623 = vmatpush.msra.mxu0 %v580
  %624 = vmatmul.f32.gmra.mxu0 %v600
  %v625 = vpop.f32.mrf.mxu0
  %v626 = vadd.f32 %v587, %v625
  %627 = vmatmul.f32.gmra.mxu0 %v603
  %v628 = vpop.f32.mrf.mxu0
  %v629 = vadd.f32 %v592, %v628
  %630 = vmatmul.f32.gmra.mxu0 %v606
  %v631 = vpop.f32.mrf.mxu0
  %v632 = vadd.f32 %v597, %v631
  %633 = vdwg.mxu0
  %v634 = vmul.f32 %v626, 1.442695
  %v635 = vpow.pop %v634
  %v636 = vmul.f32 %v629, 1.442695
  %v637 = vpow.pop %v636
  %v638 = vmul.f32 %v635, %v512
  %v639 = vmul.f32 %v637, %v513
  %v642 = vrot.slane %v629, 4
  %v643 = vrot.slane %v632, 4
  %v644 = vsel %vm547, %v642, %v643
  %v647 = vadd.f32 %v638, %v644
  %v648 = vadd.f32 %v639, %v643
  %649 = vst.msk [vmem:[%s71 + $0x14] sm:$0xff] %vm153, %v647
  %vm650 = vcmask 125952
  %651 = vst.msk [vmem:[%s71 + $0x1c] sm:$0xf] %vm650, %v648
  %v652 = vsel %vm153, %v626, 0.0
  %v653 = vsel %vm650, %v629, 0.0
  %v654 = vadd.f32 %v652, %v653
  %v655 = vrot.slane %v654, 4
  %v656 = vadd.f32 %v654, %v655
  %v657 = vrot.slane %v656, 2
  %v658 = vadd.f32 %v656, %v657
  %v659 = vrot.slane %v658, 1
  %v660 = vadd.f32 %v658, %v659
  %v661 = vadd.f32 %v495, %v660
  %v662 = vld [vmem:[%s31] sm:$0xff]
  %v663 = vld [vmem:[%s31 + $0x8] sm:$0xff]
  %v664 = vld [vmem:[%s31 + $0x10] sm:$0xff]
  %v665 = vld [vmem:[%s31 + $0x18] sm:$0xff]
  %v666 = vld [vmem:[%s33] sm:$0xff]
  %v667 = vld [vmem:[%s33 + $0x8] sm:$0xff]
  %v668 = vld [vmem:[%s33 + $0x10] sm:$0xff]
  %v669 = vld [vmem:[%s33 + $0x18] sm:$0xff]
  %v670 = vld [vmem:[%s35] sm:$0xff]
  %v671 = vld [vmem:[%s35 + $0x8] sm:$0xff]
  %v672 = vld [vmem:[%s35 + $0x10] sm:$0xff]
  %v673 = vld [vmem:[%s37] sm:$0xff]
  %v674 = vld [vmem:[%s37 + $0x8] sm:$0xff]
  %v675 = vld [vmem:[%s37 + $0x10] sm:$0xff]
  %v676 = vld [vmem:[%s71 + $0x8] sm:$0xff]
  %v677 = vld [vmem:[%s71 + $0x10] sm:$0xf]
  %v678 = vld [vmem:[%s71 + $0x14] sm:$0xff]
  %v679 = vld [vmem:[%s71 + $0x1c] sm:$0xf]
  %681 = vset.pattern.permute.xlu0 0
  %682 = vperm.xlu0 %681, %v666
  %v683 = vpop.permute.xlu0 %682
  %686 = vset.pattern.permute.xlu0 0
  %687 = vperm.xlu0 %686, %v667
  %v688 = vpop.permute.xlu0 %687
  %691 = vset.pattern.permute.xlu0 0
  %692 = vperm.xlu0 %691, %v668
  %v693 = vpop.permute.xlu0 %692
  %696 = vset.pattern.permute.xlu0 0
  %697 = vperm.xlu0 %696, %v669
  %v698 = vpop.permute.xlu0 %697
  %v701 = vsel %vm534, %v662, 0
  %v704 = vsel %vm534, %v663, 0
  %v707 = vsel %vm534, %v664, 0
  %v710 = vsel %vm534, %v665, 0
  %v713 = vsel %vm547, %v677, 0
  %715 = vmatpush.msra.mxu0 0.0
  %716 = vmatpush.msra.mxu0 0.0
  %717 = vmatpush.msra.mxu0 0.0
  %718 = vmatpush.msra.mxu0 0.0
  %719 = vmatpush.msra.mxu0 0.0
  %720 = vmatpush.msra.mxu0 0.0
  %721 = vmatpush.msra.mxu0 0.0
  %722 = vmatpush.msra.mxu0 0.0
  %723 = vmatpush.msra.mxu0 0.0
  %724 = vmatpush.msra.mxu0 0.0
  %725 = vmatpush.msra.mxu0 %v713
  %726 = vmatpush.msra.mxu0 %v676
  %727 = vmatpush.msra.mxu0 %v161
  %728 = vmatpush.msra.mxu0 %v160
  %729 = vmatpush.msra.mxu0 %v159
  %730 = vmatpush.msra.mxu0 %v158
  %731 = vmatmul.f32.gmra.mxu0 %v701
  %v732 = vpop.f32.mrf.mxu0
  %v733 = vadd.f32 %v683, %v732
  %734 = vmatmul.f32.gmra.mxu0 %v704
  %v735 = vpop.f32.mrf.mxu0
  %v736 = vadd.f32 %v688, %v735
  %737 = vmatmul.f32.gmra.mxu0 %v707
  %v738 = vpop.f32.mrf.mxu0
  %v739 = vadd.f32 %v693, %v738
  %740 = vmatmul.f32.gmra.mxu0 %v710
  %v741 = vpop.f32.mrf.mxu0
  %v742 = vadd.f32 %v698, %v741
  %743 = vdwg.mxu0
  %v744 = vmax.f32 %v733, 0.0
  %v745 = vmax.f32 %v736, 0.0
  %v746 = vmax.f32 %v739, 0.0
  %v747 = vmax.f32 %v742, 0.0
  %749 = vset.pattern.permute.xlu0 0
  %750 = vperm.xlu0 %749, %v673
  %v751 = vpop.permute.xlu0 %750
  %754 = vset.pattern.permute.xlu0 0
  %755 = vperm.xlu0 %754, %v674
  %v756 = vpop.permute.xlu0 %755
  %759 = vset.pattern.permute.xlu0 0
  %760 = vperm.xlu0 %759, %v675
  %v761 = vpop.permute.xlu0 %760
  %v764 = vsel %vm268, %v670, 0
  %v767 = vsel %vm268, %v671, 0
  %v770 = vsel %vm268, %v672, 0
  %772 = vmatpush.msra.mxu0 0.0
  %773 = vmatpush.msra.mxu0 0.0
  %774 = vmatpush.msra.mxu0 0.0
  %775 = vmatpush.msra.mxu0 0.0
  %776 = vmatpush.msra.mxu0 0.0
  %777 = vmatpush.msra.mxu0 0.0
  %778 = vmatpush.msra.mxu0 0.0
  %779 = vmatpush.msra.mxu0 0.0
  %780 = vmatpush.msra.mxu0 0.0
  %781 = vmatpush.msra.mxu0 0.0
  %782 = vmatpush.msra.mxu0 0.0
  %783 = vmatpush.msra.mxu0 0.0
  %784 = vmatpush.msra.mxu0 %v747
  %785 = vmatpush.msra.mxu0 %v746
  %786 = vmatpush.msra.mxu0 %v745
  %787 = vmatpush.msra.mxu0 %v744
  %788 = vmatmul.f32.gmra.mxu0 %v764
  %v789 = vpop.f32.mrf.mxu0
  %v790 = vadd.f32 %v751, %v789
  %791 = vmatmul.f32.gmra.mxu0 %v767
  %v792 = vpop.f32.mrf.mxu0
  %v793 = vadd.f32 %v756, %v792
  %794 = vmatmul.f32.gmra.mxu0 %v770
  %v795 = vpop.f32.mrf.mxu0
  %v796 = vadd.f32 %v761, %v795
  %797 = vdwg.mxu0
  %v798 = vmul.f32 %v790, 1.442695
  %v799 = vpow.pop %v798
  %v800 = vmul.f32 %v793, 1.442695
  %v801 = vpow.pop %v800
  %v802 = vmul.f32 %v799, %v678
  %v803 = vmul.f32 %v801, %v679
  %v806 = vrot.slane %v793, 4
  %v807 = vrot.slane %v796, 4
  %v808 = vsel %vm547, %v806, %v807
  %v811 = vadd.f32 %v802, %v808
  %v812 = vadd.f32 %v803, %v807
  %813 = vst.msk [vmem:[%s71 + $0x14] sm:$0xff] %vm153, %v811
  %814 = vst.msk [vmem:[%s71 + $0x1c] sm:$0xf] %vm650, %v812
  %v815 = vsel %vm153, %v790, 0.0
  %v816 = vsel %vm650, %v793, 0.0
  %v817 = vadd.f32 %v815, %v816
  %v818 = vrot.slane %v817, 4
  %v819 = vadd.f32 %v817, %v818
  %v820 = vrot.slane %v819, 2
  %v821 = vadd.f32 %v819, %v820
  %v822 = vrot.slane %v821, 1
  %v823 = vadd.f32 %v821, %v822
  %v824 = vadd.f32 %v661, %v823
  %v825 = vld [vmem:[%s39] sm:$0xff]
  %v826 = vld [vmem:[%s39 + $0x8] sm:$0xff]
  %v827 = vld [vmem:[%s39 + $0x10] sm:$0xff]
  %v828 = vld [vmem:[%s39 + $0x18] sm:$0xff]
  %v829 = vld [vmem:[%s41] sm:$0xff]
  %v830 = vld [vmem:[%s41 + $0x8] sm:$0xff]
  %v831 = vld [vmem:[%s41 + $0x10] sm:$0xff]
  %v832 = vld [vmem:[%s41 + $0x18] sm:$0xff]
  %v833 = vld [vmem:[%s43] sm:$0xff]
  %v834 = vld [vmem:[%s43 + $0x8] sm:$0xff]
  %v835 = vld [vmem:[%s45] sm:$0xff]
  %v836 = vld [vmem:[%s45 + $0x8] sm:$0xff]
  %v837 = vld [vmem:[%s71 + $0x10] sm:$0xff]
  %v838 = vld [vmem:[%s71 + $0x18] sm:$0xff]
  %840 = vset.pattern.permute.xlu0 0
  %841 = vperm.xlu0 %840, %v829
  %v842 = vpop.permute.xlu0 %841
  %845 = vset.pattern.permute.xlu0 0
  %846 = vperm.xlu0 %845, %v830
  %v847 = vpop.permute.xlu0 %846
  %850 = vset.pattern.permute.xlu0 0
  %851 = vperm.xlu0 %850, %v831
  %v852 = vpop.permute.xlu0 %851
  %855 = vset.pattern.permute.xlu0 0
  %856 = vperm.xlu0 %855, %v832
  %v857 = vpop.permute.xlu0 %856
  %vm859 = vcmask 326656
  %v861 = vsel %vm859, %v825, 0
  %v864 = vsel %vm859, %v826, 0
  %v867 = vsel %vm859, %v827, 0
  %v870 = vsel %vm859, %v828, 0
  %872 = vmatpush.msra.mxu0 0.0
  %873 = vmatpush.msra.mxu0 0.0
  %874 = vmatpush.msra.mxu0 0.0
  %875 = vmatpush.msra.mxu0 0.0
  %876 = vmatpush.msra.mxu0 0.0
  %877 = vmatpush.msra.mxu0 0.0
  %878 = vmatpush.msra.mxu0 0.0
  %879 = vmatpush.msra.mxu0 0.0
  %880 = vmatpush.msra.mxu0 0.0
  %881 = vmatpush.msra.mxu0 0.0
  %882 = vmatpush.msra.mxu0 0.0
  %883 = vmatpush.msra.mxu0 %v837
  %884 = vmatpush.msra.mxu0 %v161
  %885 = vmatpush.msra.mxu0 %v160
  %886 = vmatpush.msra.mxu0 %v159
  %887 = vmatpush.msra.mxu0 %v158
  %888 = vmatmul.f32.gmra.mxu0 %v861
  %v889 = vpop.f32.mrf.mxu0
  %v890 = vadd.f32 %v842, %v889
  %891 = vmatmul.f32.gmra.mxu0 %v864
  %v892 = vpop.f32.mrf.mxu0
  %v893 = vadd.f32 %v847, %v892
  %894 = vmatmul.f32.gmra.mxu0 %v867
  %v895 = vpop.f32.mrf.mxu0
  %v896 = vadd.f32 %v852, %v895
  %897 = vmatmul.f32.gmra.mxu0 %v870
  %v898 = vpop.f32.mrf.mxu0
  %v899 = vadd.f32 %v857, %v898
  %900 = vdwg.mxu0
  %v901 = vmax.f32 %v890, 0.0
  %v902 = vmax.f32 %v893, 0.0
  %v903 = vmax.f32 %v896, 0.0
  %v904 = vmax.f32 %v899, 0.0
  %906 = vset.pattern.permute.xlu0 0
  %907 = vperm.xlu0 %906, %v835
  %v908 = vpop.permute.xlu0 %907
  %911 = vset.pattern.permute.xlu0 0
  %912 = vperm.xlu0 %911, %v836
  %v913 = vpop.permute.xlu0 %912
  %v916 = vsel %vm268, %v833, 0
  %v919 = vsel %vm268, %v834, 0
  %921 = vmatpush.msra.mxu0 0.0
  %922 = vmatpush.msra.mxu0 0.0
  %923 = vmatpush.msra.mxu0 0.0
  %924 = vmatpush.msra.mxu0 0.0
  %925 = vmatpush.msra.mxu0 0.0
  %926 = vmatpush.msra.mxu0 0.0
  %927 = vmatpush.msra.mxu0 0.0
  %928 = vmatpush.msra.mxu0 0.0
  %929 = vmatpush.msra.mxu0 0.0
  %930 = vmatpush.msra.mxu0 0.0
  %931 = vmatpush.msra.mxu0 0.0
  %932 = vmatpush.msra.mxu0 0.0
  %933 = vmatpush.msra.mxu0 %v904
  %934 = vmatpush.msra.mxu0 %v903
  %935 = vmatpush.msra.mxu0 %v902
  %936 = vmatpush.msra.mxu0 %v901
  %937 = vmatmul.f32.gmra.mxu0 %v916
  %v938 = vpop.f32.mrf.mxu0
  %v939 = vadd.f32 %v908, %v938
  %940 = vmatmul.f32.gmra.mxu0 %v919
  %v941 = vpop.f32.mrf.mxu0
  %v942 = vadd.f32 %v913, %v941
  %943 = vdwg.mxu0
  %v944 = vmul.f32 %v939, 1.442695
  %v945 = vpow.pop %v944
  %v946 = vmul.f32 %v945, %v838
  %v947 = vadd.f32 %v946, %v942
  %948 = vst.msk [vmem:[%s71 + $0x18] sm:$0xff] %vm153, %v947
  %v949 = vsel %vm153, %v939, 0.0
  %v950 = vrot.slane %v949, 4
  %v951 = vadd.f32 %v949, %v950
  %v952 = vrot.slane %v951, 2
  %v953 = vadd.f32 %v951, %v952
  %v954 = vrot.slane %v953, 1
  %v955 = vadd.f32 %v953, %v954
  %v956 = vadd.f32 %v824, %v955
  %v957 = vld [vmem:[%s47] sm:$0xff]
  %v958 = vld [vmem:[%s47 + $0x8] sm:$0xff]
  %v959 = vld [vmem:[%s47 + $0x10] sm:$0xff]
  %v960 = vld [vmem:[%s47 + $0x18] sm:$0xff]
  %v961 = vld [vmem:[%s49] sm:$0xff]
  %v962 = vld [vmem:[%s49 + $0x8] sm:$0xff]
  %v963 = vld [vmem:[%s49 + $0x10] sm:$0xff]
  %v964 = vld [vmem:[%s49 + $0x18] sm:$0xff]
  %v965 = vld [vmem:[%s51] sm:$0xff]
  %v966 = vld [vmem:[%s51 + $0x8] sm:$0xff]
  %v967 = vld [vmem:[%s53] sm:$0xff]
  %v968 = vld [vmem:[%s53 + $0x8] sm:$0xff]
  %v969 = vld [vmem:[%s71 + $0x10] sm:$0xff]
  %v970 = vld [vmem:[%s71 + $0x18] sm:$0xff]
  %972 = vset.pattern.permute.xlu0 0
  %973 = vperm.xlu0 %972, %v961
  %v974 = vpop.permute.xlu0 %973
  %977 = vset.pattern.permute.xlu0 0
  %978 = vperm.xlu0 %977, %v962
  %v979 = vpop.permute.xlu0 %978
  %982 = vset.pattern.permute.xlu0 0
  %983 = vperm.xlu0 %982, %v963
  %v984 = vpop.permute.xlu0 %983
  %987 = vset.pattern.permute.xlu0 0
  %988 = vperm.xlu0 %987, %v964
  %v989 = vpop.permute.xlu0 %988
  %v992 = vsel %vm859, %v957, 0
  %v995 = vsel %vm859, %v958, 0
  %v998 = vsel %vm859, %v959, 0
  %v1001 = vsel %vm859, %v960, 0
  %1003 = vmatpush.msra.mxu0 0.0
  %1004 = vmatpush.msra.mxu0 0.0
  %1005 = vmatpush.msra.mxu0 0.0
  %1006 = vmatpush.msra.mxu0 0.0
  %1007 = vmatpush.msra.mxu0 0.0
  %1008 = vmatpush.msra.mxu0 0.0
  %1009 = vmatpush.msra.mxu0 0.0
  %1010 = vmatpush.msra.mxu0 0.0
  %1011 = vmatpush.msra.mxu0 0.0
  %1012 = vmatpush.msra.mxu0 0.0
  %1013 = vmatpush.msra.mxu0 0.0
  %1014 = vmatpush.msra.mxu0 %v969
  %1015 = vmatpush.msra.mxu0 %v161
  %1016 = vmatpush.msra.mxu0 %v160
  %1017 = vmatpush.msra.mxu0 %v159
  %1018 = vmatpush.msra.mxu0 %v158
  %1019 = vmatmul.f32.gmra.mxu0 %v992
  %v1020 = vpop.f32.mrf.mxu0
  %v1021 = vadd.f32 %v974, %v1020
  %1022 = vmatmul.f32.gmra.mxu0 %v995
  %v1023 = vpop.f32.mrf.mxu0
  %v1024 = vadd.f32 %v979, %v1023
  %1025 = vmatmul.f32.gmra.mxu0 %v998
  %v1026 = vpop.f32.mrf.mxu0
  %v1027 = vadd.f32 %v984, %v1026
  %1028 = vmatmul.f32.gmra.mxu0 %v1001
  %v1029 = vpop.f32.mrf.mxu0
  %v1030 = vadd.f32 %v989, %v1029
  %1031 = vdwg.mxu0
  %v1032 = vmax.f32 %v1021, 0.0
  %v1033 = vmax.f32 %v1024, 0.0
  %v1034 = vmax.f32 %v1027, 0.0
  %v1035 = vmax.f32 %v1030, 0.0
  %1037 = vset.pattern.permute.xlu0 0
  %1038 = vperm.xlu0 %1037, %v967
  %v1039 = vpop.permute.xlu0 %1038
  %1042 = vset.pattern.permute.xlu0 0
  %1043 = vperm.xlu0 %1042, %v968
  %v1044 = vpop.permute.xlu0 %1043
  %v1047 = vsel %vm268, %v965, 0
  %v1050 = vsel %vm268, %v966, 0
  %1052 = vmatpush.msra.mxu0 0.0
  %1053 = vmatpush.msra.mxu0 0.0
  %1054 = vmatpush.msra.mxu0 0.0
  %1055 = vmatpush.msra.mxu0 0.0
  %1056 = vmatpush.msra.mxu0 0.0
  %1057 = vmatpush.msra.mxu0 0.0
  %1058 = vmatpush.msra.mxu0 0.0
  %1059 = vmatpush.msra.mxu0 0.0
  %1060 = vmatpush.msra.mxu0 0.0
  %1061 = vmatpush.msra.mxu0 0.0
  %1062 = vmatpush.msra.mxu0 0.0
  %1063 = vmatpush.msra.mxu0 0.0
  %1064 = vmatpush.msra.mxu0 %v1035
  %1065 = vmatpush.msra.mxu0 %v1034
  %1066 = vmatpush.msra.mxu0 %v1033
  %1067 = vmatpush.msra.mxu0 %v1032
  %1068 = vmatmul.f32.gmra.mxu0 %v1047
  %v1069 = vpop.f32.mrf.mxu0
  %v1070 = vadd.f32 %v1039, %v1069
  %1071 = vmatmul.f32.gmra.mxu0 %v1050
  %v1072 = vpop.f32.mrf.mxu0
  %v1073 = vadd.f32 %v1044, %v1072
  %1074 = vdwg.mxu0
  %v1075 = vmul.f32 %v1070, 1.442695
  %v1076 = vpow.pop %v1075
  %v1077 = vmul.f32 %v1076, %v970
  %v1078 = vadd.f32 %v1077, %v1073
  %1079 = vst.msk [vmem:[%s71 + $0x18] sm:$0xff] %vm153, %v1078
  %v1080 = vsel %vm153, %v1070, 0.0
  %v1081 = vrot.slane %v1080, 4
  %v1082 = vadd.f32 %v1080, %v1081
  %v1083 = vrot.slane %v1082, 2
  %v1084 = vadd.f32 %v1082, %v1083
  %v1085 = vrot.slane %v1084, 1
  %v1086 = vadd.f32 %v1084, %v1085
  %v1087 = vadd.f32 %v956, %v1086
  %v1088 = vld [vmem:[%s55] sm:$0xff]
  %v1089 = vld [vmem:[%s55 + $0x8] sm:$0xff]
  %v1090 = vld [vmem:[%s55 + $0x10] sm:$0xff]
  %v1091 = vld [vmem:[%s55 + $0x18] sm:$0xff]
  %v1092 = vld [vmem:[%s57] sm:$0xff]
  %v1093 = vld [vmem:[%s57 + $0x8] sm:$0xff]
  %v1094 = vld [vmem:[%s57 + $0x10] sm:$0xff]
  %v1095 = vld [vmem:[%s57 + $0x18] sm:$0xff]
  %v1096 = vld [vmem:[%s59] sm:$0xff]
  %v1097 = vld [vmem:[%s61] sm:$0xff]
  %v1098 = vld [vmem:[%s71 + $0x18] sm:$0xf]
  %v1099 = vld [vmem:[%s71 + $0x1c] sm:$0xf]
  %1101 = vset.pattern.permute.xlu0 0
  %1102 = vperm.xlu0 %1101, %v1092
  %v1103 = vpop.permute.xlu0 %1102
  %1106 = vset.pattern.permute.xlu0 0
  %1107 = vperm.xlu0 %1106, %v1093
  %v1108 = vpop.permute.xlu0 %1107
  %1111 = vset.pattern.permute.xlu0 0
  %1112 = vperm.xlu0 %1111, %v1094
  %v1113 = vpop.permute.xlu0 %1112
  %1116 = vset.pattern.permute.xlu0 0
  %1117 = vperm.xlu0 %1116, %v1095
  %v1118 = vpop.permute.xlu0 %1117
  %vm1120 = vcmask 293888
  %v1122 = vsel %vm1120, %v1088, 0
  %v1125 = vsel %vm1120, %v1089, 0
  %v1128 = vsel %vm1120, %v1090, 0
  %v1131 = vsel %vm1120, %v1091, 0
  %v1134 = vsel %vm547, %v1098, 0
  %1136 = vmatpush.msra.mxu0 0.0
  %1137 = vmatpush.msra.mxu0 0.0
  %1138 = vmatpush.msra.mxu0 0.0
  %1139 = vmatpush.msra.mxu0 0.0
  %1140 = vmatpush.msra.mxu0 0.0
  %1141 = vmatpush.msra.mxu0 0.0
  %1142 = vmatpush.msra.mxu0 0.0
  %1143 = vmatpush.msra.mxu0 0.0
  %1144 = vmatpush.msra.mxu0 0.0
  %1145 = vmatpush.msra.mxu0 0.0
  %1146 = vmatpush.msra.mxu0 0.0
  %1147 = vmatpush.msra.mxu0 %v1134
  %1148 = vmatpush.msra.mxu0 %v161
  %1149 = vmatpush.msra.mxu0 %v160
  %1150 = vmatpush.msra.mxu0 %v159
  %1151 = vmatpush.msra.mxu0 %v158
  %1152 = vmatmul.f32.gmra.mxu0 %v1122
  %v1153 = vpop.f32.mrf.mxu0
  %v1154 = vadd.f32 %v1103, %v1153
  %1155 = vmatmul.f32.gmra.mxu0 %v1125
  %v1156 = vpop.f32.mrf.mxu0
  %v1157 = vadd.f32 %v1108, %v1156
  %1158 = vmatmul.f32.gmra.mxu0 %v1128
  %v1159 = vpop.f32.mrf.mxu0
  %v1160 = vadd.f32 %v1113, %v1159
  %1161 = vmatmul.f32.gmra.mxu0 %v1131
  %v1162 = vpop.f32.mrf.mxu0
  %v1163 = vadd.f32 %v1118, %v1162
  %1164 = vdwg.mxu0
  %v1165 = vmax.f32 %v1154, 0.0
  %v1166 = vmax.f32 %v1157, 0.0
  %v1167 = vmax.f32 %v1160, 0.0
  %v1168 = vmax.f32 %v1163, 0.0
  %1170 = vset.pattern.permute.xlu0 0
  %1171 = vperm.xlu0 %1170, %v1097
  %v1172 = vpop.permute.xlu0 %1171
  %v1175 = vsel %vm268, %v1096, 0
  %1177 = vmatpush.msra.mxu0 0.0
  %1178 = vmatpush.msra.mxu0 0.0
  %1179 = vmatpush.msra.mxu0 0.0
  %1180 = vmatpush.msra.mxu0 0.0
  %1181 = vmatpush.msra.mxu0 0.0
  %1182 = vmatpush.msra.mxu0 0.0
  %1183 = vmatpush.msra.mxu0 0.0
  %1184 = vmatpush.msra.mxu0 0.0
  %1185 = vmatpush.msra.mxu0 0.0
  %1186 = vmatpush.msra.mxu0 0.0
  %1187 = vmatpush.msra.mxu0 0.0
  %1188 = vmatpush.msra.mxu0 0.0
  %1189 = vmatpush.msra.mxu0 %v1168
  %1190 = vmatpush.msra.mxu0 %v1167
  %1191 = vmatpush.msra.mxu0 %v1166
  %1192 = vmatpush.msra.mxu0 %v1165
  %1193 = vmatmul.f32.gmra.mxu0 %v1175
  %v1194 = vpop.f32.mrf.mxu0
  %v1195 = vadd.f32 %v1172, %v1194
  %1196 = vdwg.mxu0
  %v1197 = vmul.f32 %v1195, 1.442695
  %v1198 = vpow.pop %v1197
  %v1199 = vmul.f32 %v1198, %v1099
  %v1201 = vrot.slane %v1195, 4
  %v1203 = vadd.f32 %v1199, %v1201
  %1204 = vst.msk [vmem:[%s71 + $0x1c] sm:$0xf] %vm650, %v1203
  %v1205 = vsel %vm650, %v1195, 0.0
  %v1206 = vrot.slane %v1205, 4
  %v1207 = vadd.f32 %v1205, %v1206
  %v1208 = vrot.slane %v1207, 2
  %v1209 = vadd.f32 %v1207, %v1208
  %v1210 = vrot.slane %v1209, 1
  %v1211 = vadd.f32 %v1209, %v1210
  %v1212 = vadd.f32 %v1087, %v1211
  %v1213 = vld [vmem:[%s63] sm:$0xff]
  %v1214 = vld [vmem:[%s63 + $0x8] sm:$0xff]
  %v1215 = vld [vmem:[%s63 + $0x10] sm:$0xff]
  %v1216 = vld [vmem:[%s63 + $0x18] sm:$0xff]
  %v1217 = vld [vmem:[%s65] sm:$0xff]
  %v1218 = vld [vmem:[%s65 + $0x8] sm:$0xff]
  %v1219 = vld [vmem:[%s65 + $0x10] sm:$0xff]
  %v1220 = vld [vmem:[%s65 + $0x18] sm:$0xff]
  %v1221 = vld [vmem:[%s67] sm:$0xff]
  %v1222 = vld [vmem:[%s69] sm:$0xff]
  %v1223 = vld [vmem:[%s71 + $0x18] sm:$0xf]
  %v1224 = vld [vmem:[%s71 + $0x1c] sm:$0xf]
  %1226 = vset.pattern.permute.xlu0 0
  %1227 = vperm.xlu0 %1226, %v1217
  %v1228 = vpop.permute.xlu0 %1227
  %1231 = vset.pattern.permute.xlu0 0
  %1232 = vperm.xlu0 %1231, %v1218
  %v1233 = vpop.permute.xlu0 %1232
  %1236 = vset.pattern.permute.xlu0 0
  %1237 = vperm.xlu0 %1236, %v1219
  %v1238 = vpop.permute.xlu0 %1237
  %1241 = vset.pattern.permute.xlu0 0
  %1242 = vperm.xlu0 %1241, %v1220
  %v1243 = vpop.permute.xlu0 %1242
  %v1246 = vsel %vm1120, %v1213, 0
  %v1249 = vsel %vm1120, %v1214, 0
  %v1252 = vsel %vm1120, %v1215, 0
  %v1255 = vsel %vm1120, %v1216, 0
  %v1258 = vsel %vm547, %v1223, 0
  %1260 = vmatpush.msra.mxu0 0.0
  %1261 = vmatpush.msra.mxu0 0.0
  %1262 = vmatpush.msra.mxu0 0.0
  %1263 = vmatpush.msra.mxu0 0.0
  %1264 = vmatpush.msra.mxu0 0.0
  %1265 = vmatpush.msra.mxu0 0.0
  %1266 = vmatpush.msra.mxu0 0.0
  %1267 = vmatpush.msra.mxu0 0.0
  %1268 = vmatpush.msra.mxu0 0.0
  %1269 = vmatpush.msra.mxu0 0.0
  %1270 = vmatpush.msra.mxu0 0.0
  %1271 = vmatpush.msra.mxu0 %v1258
  %1272 = vmatpush.msra.mxu0 %v161
  %1273 = vmatpush.msra.mxu0 %v160
  %1274 = vmatpush.msra.mxu0 %v159
  %1275 = vmatpush.msra.mxu0 %v158
  %1276 = vmatmul.f32.gmra.mxu0 %v1246
  %v1277 = vpop.f32.mrf.mxu0
  %v1278 = vadd.f32 %v1228, %v1277
  %1279 = vmatmul.f32.gmra.mxu0 %v1249
  %v1280 = vpop.f32.mrf.mxu0
  %v1281 = vadd.f32 %v1233, %v1280
  %1282 = vmatmul.f32.gmra.mxu0 %v1252
  %v1283 = vpop.f32.mrf.mxu0
  %v1284 = vadd.f32 %v1238, %v1283
  %1285 = vmatmul.f32.gmra.mxu0 %v1255
  %v1286 = vpop.f32.mrf.mxu0
  %v1287 = vadd.f32 %v1243, %v1286
  %1288 = vdwg.mxu0
  %v1289 = vmax.f32 %v1278, 0.0
  %v1290 = vmax.f32 %v1281, 0.0
  %v1291 = vmax.f32 %v1284, 0.0
  %v1292 = vmax.f32 %v1287, 0.0
  %1294 = vset.pattern.permute.xlu0 0
  %1295 = vperm.xlu0 %1294, %v1222
  %v1296 = vpop.permute.xlu0 %1295
  %v1299 = vsel %vm268, %v1221, 0
  %1301 = vmatpush.msra.mxu0 0.0
  %1302 = vmatpush.msra.mxu0 0.0
  %1303 = vmatpush.msra.mxu0 0.0
  %1304 = vmatpush.msra.mxu0 0.0
  %1305 = vmatpush.msra.mxu0 0.0
  %1306 = vmatpush.msra.mxu0 0.0
  %1307 = vmatpush.msra.mxu0 0.0
  %1308 = vmatpush.msra.mxu0 0.0
  %1309 = vmatpush.msra.mxu0 0.0
  %1310 = vmatpush.msra.mxu0 0.0
  %1311 = vmatpush.msra.mxu0 0.0
  %1312 = vmatpush.msra.mxu0 0.0
  %1313 = vmatpush.msra.mxu0 %v1292
  %1314 = vmatpush.msra.mxu0 %v1291
  %1315 = vmatpush.msra.mxu0 %v1290
  %1316 = vmatpush.msra.mxu0 %v1289
  %1317 = vmatmul.f32.gmra.mxu0 %v1299
  %v1318 = vpop.f32.mrf.mxu0
  %v1319 = vadd.f32 %v1296, %v1318
  %1320 = vdwg.mxu0
  %v1321 = vmul.f32 %v1319, 1.442695
  %v1322 = vpow.pop %v1321
  %v1323 = vmul.f32 %v1322, %v1224
  %v1325 = vrot.slane %v1319, 4
  %v1327 = vadd.f32 %v1323, %v1325
  %1328 = vst.msk [vmem:[%s71 + $0x1c] sm:$0xf] %vm650, %v1327
  %v1329 = vsel %vm650, %v1319, 0.0
  %v1330 = vrot.slane %v1329, 4
  %v1331 = vadd.f32 %v1329, %v1330
  %v1332 = vrot.slane %v1331, 2
  %v1333 = vadd.f32 %v1331, %v1332
  %v1334 = vrot.slane %v1333, 1
  %v1335 = vadd.f32 %v1333, %v1334
  %v1336 = vadd.f32 %v1212, %v1335
  %v1337 = vld [vmem:[%s5] sm:$0x3]
  %v1338 = vmul.f32 %v1336, %v1337
  %vm1339 = vcmask 123904
  %v1340 = vsel %vm1339, %v1338, 0.0
  %1341 = vadd.xlane.f32.xlu0 %v1340
  %v1342 = vpop.xlane.xlu0 %1341
  %vm1343 = vcmask 1024
  %1344 = vst.msk [vmem:[%s73] sm:$0x3] %vm1343, %v1342
  // Predicated region
  $region142: #{flow_aff_forward.1} parent=0 // pred_check
    _
  $region143: #{flow_aff_forward.1} parent=0 // pred_check_branch
    %1346 = sbr.rel (0) target = $region145
  $region144: #{flow_aff_forward.1} parent=0 // pred_region
    _
  $region145: #{flow_aff_forward.1} parent=0 // pred_fallthru
    _
  // Predicated region
  $region146: #{flow_aff_forward.1} parent=0 // pred_check
    _
  $region147: #{flow_aff_forward.1} parent=0 // pred_check_branch
    %1348 = sbr.rel (0) target = $region149
  $region148: #{flow_aff_forward.1} parent=0 // pred_region
    _
  $region149: #{flow_aff_forward.1} parent=0 // pred_fallthru
    _
  // Predicated region
  $region150: #{flow_aff_forward.1} parent=0 // pred_check
    _
  $region151: #{flow_aff_forward.1} parent=0 // pred_check_branch
    %1350 = sbr.rel (0) target = $region153
  $region152: #{flow_aff_forward.1} parent=0 // pred_region
    _
  $region153: #{flow_aff_forward.1} parent=0 // pred_fallthru
    _
  // Predicated region
  $region154: #{flow_aff_forward.1} parent=0 // pred_check
    _
  $region155: #{flow_aff_forward.1} parent=0 // pred_check_branch
    %1352 = sbr.rel (0) target = $region157
  $region156: #{flow_aff_forward.1} parent=0 // pred_region
    _
  $region157: #{flow_aff_forward.1} parent=0 // pred_fallthru
    _

</llo_original>
